<compile_context>
chip_gen: v7x
topology: tpu7x:2x2x1
jax: 0.10.0
libtpu: 0.0.40
codegen_flags: <defaults>
</compile_context>

<pallas_src>
import functools

import jax
import jax.numpy as jnp
from jax.experimental import pallas as pl
from jax.experimental.pallas import tpu as pltpu


def _round_up(x, m):
    return (x + m - 1) // m * m


def _vmem_spec():
    return pl.BlockSpec(memory_space=pltpu.MemorySpace.VMEM)


def _vmem_budget_bytes():
    """~75% of this generation's physical VMEM (v5e/v6e: ~96 MiB, v7x: ~48 MiB)."""
    try:
        cap = int(pltpu.get_tpu_info().vmem_capacity_bytes)
        return (cap * 3) // 4
    except Exception:
        return 48 << 20   # conservative fallback that is safe on every generation


# ----------------------------- fused Pallas kernel ---------------------------

def _fused_gsage_kernel(*refs, num_layers):
    """All SAGE layers + global mean pool; B, H, P, weights stay VMEM-resident.

    refs = (b_adj, inv_deg, p01, inv_cnt, x, wl0, wr0, b0, ..., out)
      b_adj   : [N_pad, N_pad] bf16  edge-count adjacency (B[t, s] = #edges s->t)
      inv_deg : [N_pad, 1]     f32   1/in_deg (0 for isolated / padded rows)
      p01     : [G_pad, N_pad] bf16  0/1 graph membership
      inv_cnt : [G_pad, 1]     f32   1/|graph g|
      x       : [N_pad, F_pad] bf16  node features
      wl_i    : [F_pad, F_pad] bf16  neighbor (aggregated) weight
      wr_i    : [F_pad, F_pad] bf16  root (self) weight
      b_i     : [1, F_pad]     f32   bias
      out     : [G_pad, F_pad] f32
    """
    b_ref, invdeg_ref, p_ref, invcnt_ref, x_ref = refs[:5]
    o_ref = refs[-1]
    wb = refs[5:-1]

    b_adj = b_ref[...]
    inv_deg = invdeg_ref[...]
    h = x_ref[...]                                        # bf16 activations

    for i in range(num_layers):
        wl = wb[3 * i][...]
        wr = wb[3 * i + 1][...]
        bias = wb[3 * i + 2][...]
        # neighbor mean aggregation: MXU matmul (f32 acc) + exact f32 VPU scale
        agg = jnp.dot(b_adj, h, preferred_element_type=jnp.float32) * inv_deg
        # SAGEConv: lin_l(agg) + lin_r(x) + b  -- two matmuls, shared f32 acc
        hf = (jnp.dot(agg.astype(jnp.bfloat16), wl,
                      preferred_element_type=jnp.float32)
              + jnp.dot(h, wr, preferred_element_type=jnp.float32)
              + bias)
        if i < num_layers - 1:
            hf = jnp.maximum(hf, 0.0)                     # ReLU on hidden layers
        h = hf.astype(jnp.bfloat16)

    # global mean pool: 0/1 membership matmul + exact f32 1/count scale
    o_ref[...] = (jnp.dot(p_ref[...], h, preferred_element_type=jnp.float32)
                  * invcnt_ref[...])


# ------------------------------ glue (plain JAX) -----------------------------

def build_adj_parts(edge_index, num_nodes, rows):
    """B[t, s] = #edges s->t (padded to [rows, rows]) and f32 inv in-degree."""
    src, dst = edge_index[0], edge_index[1]
    b = jnp.zeros((rows, rows), jnp.float32).at[dst, src].add(1.0)
    deg = jnp.zeros((rows,), jnp.float32).at[dst].add(1.0)
    inv_deg = jnp.where(deg > 0, 1.0 / jnp.maximum(deg, 1.0), 0.0)
    del num_nodes
    return b, inv_deg[:, None]


def build_pool_parts(batch, num_nodes, g_rows, n_cols):
    """0/1 membership matrix [g_rows, n_cols] and f32 1/|graph| column."""
    p = jnp.zeros((g_rows, n_cols), jnp.float32).at[
        batch, jnp.arange(num_nodes)].set(1.0)
    cnt = jnp.zeros((g_rows,), jnp.float32).at[batch].add(1.0)
    inv_cnt = jnp.where(cnt > 0, 1.0 / jnp.maximum(cnt, 1.0), 0.0)
    return p, inv_cnt[:, None]


def init_params(key, in_channels, hidden_channels, num_layers, out_channels):
    """Deterministic glorot-ish init; each SAGEConv has Wl (agg), Wr (root), bias."""
    dims = [in_channels] + [hidden_channels] * (num_layers - 1) + [out_channels]
    params = []
    for i in range(num_layers):
        fin, fout = dims[i], dims[i + 1]
        key, k1, k2 = jax.random.split(key, 3)
        scale = (6.0 / (fin + fout)) ** 0.5
        wl = jax.random.uniform(k1, (fin, fout), jnp.float32, -scale, scale)
        wr = jax.random.uniform(k2, (fin, fout), jnp.float32, -scale, scale)
        b = jnp.zeros((fout,), jnp.float32)
        params.append((wl, wr, b))
    return params


def graphsage_forward(x, edge_index, batch, params, num_graphs):
    # F.dropout(training=False) is the identity, so it is intentionally omitted.
    n, fin0 = x.shape
    num_layers = len(params)
    out_channels = params[-1][0].shape[1]

    dims = [fin0] + [p[0].shape[1] for p in params]
    f_pad = max(_round_up(d, 128) for d in dims)
    n_pad = _round_up(n, 128)
    g_pad = _round_up(num_graphs, 8)

    b_adj, inv_deg = build_adj_parts(edge_index, n, n_pad)
    p01, inv_cnt = build_pool_parts(batch, n, g_pad, n_pad)

    x_p = jnp.zeros((n_pad, f_pad), jnp.float32).at[:n, :fin0].set(x)

    flat_inputs = [b_adj.astype(jnp.bfloat16), inv_deg,
                   p01.astype(jnp.bfloat16), inv_cnt,
                   x_p.astype(jnp.bfloat16)]
    for (wl, wr, b) in params:
        fin, fout = wl.shape
        wl_p = jnp.zeros((f_pad, f_pad), jnp.float32).at[:fin, :fout].set(wl)
        wr_p = jnp.zeros((f_pad, f_pad), jnp.float32).at[:fin, :fout].set(wr)
        b_p = jnp.zeros((1, f_pad), jnp.float32).at[0, :fout].set(b)
        flat_inputs += [wl_p.astype(jnp.bfloat16), wr_p.astype(jnp.bfloat16), b_p]

    flops = (num_layers * (2 * n_pad * n_pad * f_pad        # aggregation B @ H
                           + 2 * 2 * n_pad * f_pad * f_pad)  # two linears
             + 2 * g_pad * n_pad * f_pad)                     # pooling
    bytes_accessed = int(sum(t.size * t.dtype.itemsize for t in flat_inputs)
                         + g_pad * f_pad * 4)

    out = pl.pallas_call(
        functools.partial(_fused_gsage_kernel, num_layers=num_layers),
        out_shape=jax.ShapeDtypeStruct((g_pad, f_pad), jnp.float32),
        in_specs=[_vmem_spec() for _ in flat_inputs],
        out_specs=_vmem_spec(),
        compiler_params=pltpu.CompilerParams(
            vmem_limit_bytes=_vmem_budget_bytes()),
        cost_estimate=pl.CostEstimate(flops=flops, transcendentals=0,
                                      bytes_accessed=bytes_accessed),
    )(*flat_inputs)
    return out[:num_graphs, :out_channels]


# --------------------------------- references --------------------------------

def graphsage_reference_f32(x, edge_index, batch, params, num_graphs):
    """Pure f32 dense reference (PyG SAGEConv mean aggregation + global_mean_pool)."""
    n = x.shape[0]
    b_adj, inv_deg = build_adj_parts(edge_index, n, n)
    p01, inv_cnt = build_pool_parts(batch, n, num_graphs, n)
    h = x
    for i, (wl, wr, b) in enumerate(params):
        agg = (b_adj @ h) * inv_deg
        h = agg @ wl + h @ wr + b
        if i < len(params) - 1:
            h = jnp.maximum(h, 0.0)
    return (p01 @ h) * inv_cnt


def graphsage_reference_bf16(x, edge_index, batch, params, num_graphs):
    """Mirrors the kernel numerics: bf16 operands, f32 accumulation, f32 scales."""
    bf = jnp.bfloat16
    n = x.shape[0]
    b_adj, inv_deg = build_adj_parts(edge_index, n, n)
    p01, inv_cnt = build_pool_parts(batch, n, num_graphs, n)
    b_adj = b_adj.astype(bf)
    p01 = p01.astype(bf)
    h = x.astype(bf)
    for i, (wl, wr, b) in enumerate(params):
        agg = jnp.dot(b_adj, h, preferred_element_type=jnp.float32) * inv_deg
        hf = (jnp.dot(agg.astype(bf), wl.astype(bf),
                      preferred_element_type=jnp.float32)
              + jnp.dot(h, wr.astype(bf), preferred_element_type=jnp.float32)
              + b)
        if i < len(params) - 1:
            hf = jnp.maximum(hf, 0.0)
        h = hf.astype(bf)
    return jnp.dot(p01, h, preferred_element_type=jnp.float32) * inv_cnt


# ----------------------------------- main -------------------------------------

if __name__ == "__main__":
    key = jax.random.PRNGKey(0)

    in_channels, hidden_channels, num_layers, out_channels = 6, 16, 3, 4
    num_nodes, num_graphs = 12, 2

    # Two graphs of 6 nodes each, bidirectional ring edges within each graph.
    src, dst = [], []
    for g in range(num_graphs):
        base = g * 6
        for i in range(6):
            a_n, b_n = base + i, base + (i + 1) % 6
            src += [a_n, b_n]
            dst += [b_n, a_n]
    edge_index = jnp.array([src, dst], dtype=jnp.int32)
    batch = jnp.array([0] * 6 + [1] * 6, dtype=jnp.int32)

    key, kx = jax.random.split(key)
    x = jax.random.normal(kx, (num_nodes, in_channels), jnp.float32)

    params = init_params(key, in_channels, hidden_channels, num_layers,
                         out_channels)

    out = graphsage_forward(x, edge_index, batch, params, num_graphs)
    out = jax.block_until_ready(out)
    assert out.shape == (num_graphs, out_channels)

    # Primary check: kernel vs JAX reference with identical bf16 quantization.
    ref_bf16 = graphsage_reference_bf16(x, edge_index, batch, params, num_graphs)
    assert jnp.allclose(out, ref_bf16, atol=1e-3, rtol=1e-3), (
        f"bf16-mirror mismatch:\n{out}\n{ref_bf16}")

    # Sanity check vs full-f32 reference using a relative-error metric.
    ref_f32 = graphsage_reference_f32(x, edge_index, batch, params, num_graphs)
    rel_err = float(jnp.max(jnp.abs(out - ref_f32))
                    / (jnp.max(jnp.abs(ref_f32)) + 1e-6))
    assert rel_err < 2e-2, f"relative error vs f32 reference too large: {rel_err}"

    print("KERNEL_OK")
</pallas_src>

<mosaic_0001>
module attributes {stable_mosaic.version = 11 : i64} {
  func.func @_fused_gsage_kernel(%arg0: memref<128x128xbf16, #tpu.memory_space<vmem>>, %arg1: memref<128x1xf32, #tpu.memory_space<vmem>>, %arg2: memref<8x128xbf16, #tpu.memory_space<vmem>>, %arg3: memref<8x1xf32, #tpu.memory_space<vmem>>, %arg4: memref<128x128xbf16, #tpu.memory_space<vmem>>, %arg5: memref<128x128xbf16, #tpu.memory_space<vmem>>, %arg6: memref<128x128xbf16, #tpu.memory_space<vmem>>, %arg7: memref<1x128xf32, #tpu.memory_space<vmem>>, %arg8: memref<128x128xbf16, #tpu.memory_space<vmem>>, %arg9: memref<128x128xbf16, #tpu.memory_space<vmem>>, %arg10: memref<1x128xf32, #tpu.memory_space<vmem>>, %arg11: memref<128x128xbf16, #tpu.memory_space<vmem>>, %arg12: memref<128x128xbf16, #tpu.memory_space<vmem>>, %arg13: memref<1x128xf32, #tpu.memory_space<vmem>>, %arg14: memref<8x128xf32, #tpu.memory_space<vmem>>) attributes {dimension_semantics = [], scalar_prefetch = 0 : i64, scratch_operands = 0 : i64, tpu.core_type = #tpu.core_type<tc>} {
    %c0 = arith.constant 0 : index
    %c0_0 = arith.constant 0 : index
    %0 = vector.load %arg0[%c0, %c0_0] : memref<128x128xbf16, #tpu.memory_space<vmem>>, vector<128x128xbf16>
    %c0_1 = arith.constant 0 : index
    %c0_2 = arith.constant 0 : index
    %1 = vector.load %arg1[%c0_1, %c0_2] : memref<128x1xf32, #tpu.memory_space<vmem>>, vector<128x1xf32>
    %c0_3 = arith.constant 0 : index
    %c0_4 = arith.constant 0 : index
    %2 = vector.load %arg4[%c0_3, %c0_4] : memref<128x128xbf16, #tpu.memory_space<vmem>>, vector<128x128xbf16>
    %c0_5 = arith.constant 0 : index
    %c0_6 = arith.constant 0 : index
    %3 = vector.load %arg5[%c0_5, %c0_6] : memref<128x128xbf16, #tpu.memory_space<vmem>>, vector<128x128xbf16>
    %c0_7 = arith.constant 0 : index
    %c0_8 = arith.constant 0 : index
    %4 = vector.load %arg6[%c0_7, %c0_8] : memref<128x128xbf16, #tpu.memory_space<vmem>>, vector<128x128xbf16>
    %c0_9 = arith.constant 0 : index
    %c0_10 = arith.constant 0 : index
    %5 = vector.load %arg7[%c0_9, %c0_10] : memref<1x128xf32, #tpu.memory_space<vmem>>, vector<1x128xf32>
    %cst = arith.constant dense<0.000000e+00> : vector<128x128xf32>
    %6 = tpu.matmul %0, %2, %cst {dimension_numbers = #tpu.dot_dimension_numbers<[1], [0], [0], [1], [0, 0, 1, 1], [], []>} : vector<128x128xbf16>, vector<128x128xbf16>, vector<128x128xf32> -> vector<128x128xf32>
    %7 = vector.broadcast %1 : vector<128x1xf32> to vector<128x128xf32>
    %8 = arith.mulf %6, %7 : vector<128x128xf32>
    %9 = arith.truncf %8 : vector<128x128xf32> to vector<128x128xbf16>
    %cst_11 = arith.constant dense<0.000000e+00> : vector<128x128xf32>
    %10 = tpu.matmul %9, %3, %cst_11 {dimension_numbers = #tpu.dot_dimension_numbers<[1], [0], [0], [1], [0, 0, 1, 1], [], []>} : vector<128x128xbf16>, vector<128x128xbf16>, vector<128x128xf32> -> vector<128x128xf32>
    %cst_12 = arith.constant dense<0.000000e+00> : vector<128x128xf32>
    %11 = tpu.matmul %2, %4, %cst_12 {dimension_numbers = #tpu.dot_dimension_numbers<[1], [0], [0], [1], [0, 0, 1, 1], [], []>} : vector<128x128xbf16>, vector<128x128xbf16>, vector<128x128xf32> -> vector<128x128xf32>
    %12 = arith.addf %10, %11 : vector<128x128xf32>
    %13 = vector.broadcast %5 : vector<1x128xf32> to vector<128x128xf32>
    %14 = arith.addf %12, %13 : vector<128x128xf32>
    %cst_13 = arith.constant 0.000000e+00 : f32
    %15 = vector.broadcast %cst_13 : f32 to vector<128x128xf32>
    %16 = arith.maximumf %14, %15 : vector<128x128xf32>
    %17 = arith.truncf %16 : vector<128x128xf32> to vector<128x128xbf16>
    %c0_14 = arith.constant 0 : index
    %c0_15 = arith.constant 0 : index
    %18 = vector.load %arg8[%c0_14, %c0_15] : memref<128x128xbf16, #tpu.memory_space<vmem>>, vector<128x128xbf16>
    %c0_16 = arith.constant 0 : index
    %c0_17 = arith.constant 0 : index
    %19 = vector.load %arg9[%c0_16, %c0_17] : memref<128x128xbf16, #tpu.memory_space<vmem>>, vector<128x128xbf16>
    %c0_18 = arith.constant 0 : index
    %c0_19 = arith.constant 0 : index
    %20 = vector.load %arg10[%c0_18, %c0_19] : memref<1x128xf32, #tpu.memory_space<vmem>>, vector<1x128xf32>
    %cst_20 = arith.constant dense<0.000000e+00> : vector<128x128xf32>
    %21 = tpu.matmul %0, %17, %cst_20 {dimension_numbers = #tpu.dot_dimension_numbers<[1], [0], [0], [1], [0, 0, 1, 1], [], []>} : vector<128x128xbf16>, vector<128x128xbf16>, vector<128x128xf32> -> vector<128x128xf32>
    %22 = vector.broadcast %1 : vector<128x1xf32> to vector<128x128xf32>
    %23 = arith.mulf %21, %22 : vector<128x128xf32>
    %24 = arith.truncf %23 : vector<128x128xf32> to vector<128x128xbf16>
    %cst_21 = arith.constant dense<0.000000e+00> : vector<128x128xf32>
    %25 = tpu.matmul %24, %18, %cst_21 {dimension_numbers = #tpu.dot_dimension_numbers<[1], [0], [0], [1], [0, 0, 1, 1], [], []>} : vector<128x128xbf16>, vector<128x128xbf16>, vector<128x128xf32> -> vector<128x128xf32>
    %cst_22 = arith.constant dense<0.000000e+00> : vector<128x128xf32>
    %26 = tpu.matmul %17, %19, %cst_22 {dimension_numbers = #tpu.dot_dimension_numbers<[1], [0], [0], [1], [0, 0, 1, 1], [], []>} : vector<128x128xbf16>, vector<128x128xbf16>, vector<128x128xf32> -> vector<128x128xf32>
    %27 = arith.addf %25, %26 : vector<128x128xf32>
    %28 = vector.broadcast %20 : vector<1x128xf32> to vector<128x128xf32>
    %29 = arith.addf %27, %28 : vector<128x128xf32>
    %cst_23 = arith.constant 0.000000e+00 : f32
    %30 = vector.broadcast %cst_23 : f32 to vector<128x128xf32>
    %31 = arith.maximumf %29, %30 : vector<128x128xf32>
    %32 = arith.truncf %31 : vector<128x128xf32> to vector<128x128xbf16>
    %c0_24 = arith.constant 0 : index
    %c0_25 = arith.constant 0 : index
    %33 = vector.load %arg11[%c0_24, %c0_25] : memref<128x128xbf16, #tpu.memory_space<vmem>>, vector<128x128xbf16>
    %c0_26 = arith.constant 0 : index
    %c0_27 = arith.constant 0 : index
    %34 = vector.load %arg12[%c0_26, %c0_27] : memref<128x128xbf16, #tpu.memory_space<vmem>>, vector<128x128xbf16>
    %c0_28 = arith.constant 0 : index
    %c0_29 = arith.constant 0 : index
    %35 = vector.load %arg13[%c0_28, %c0_29] : memref<1x128xf32, #tpu.memory_space<vmem>>, vector<1x128xf32>
    %cst_30 = arith.constant dense<0.000000e+00> : vector<128x128xf32>
    %36 = tpu.matmul %0, %32, %cst_30 {dimension_numbers = #tpu.dot_dimension_numbers<[1], [0], [0], [1], [0, 0, 1, 1], [], []>} : vector<128x128xbf16>, vector<128x128xbf16>, vector<128x128xf32> -> vector<128x128xf32>
    %37 = vector.broadcast %1 : vector<128x1xf32> to vector<128x128xf32>
    %38 = arith.mulf %36, %37 : vector<128x128xf32>
    %39 = arith.truncf %38 : vector<128x128xf32> to vector<128x128xbf16>
    %cst_31 = arith.constant dense<0.000000e+00> : vector<128x128xf32>
    %40 = tpu.matmul %39, %33, %cst_31 {dimension_numbers = #tpu.dot_dimension_numbers<[1], [0], [0], [1], [0, 0, 1, 1], [], []>} : vector<128x128xbf16>, vector<128x128xbf16>, vector<128x128xf32> -> vector<128x128xf32>
    %cst_32 = arith.constant dense<0.000000e+00> : vector<128x128xf32>
    %41 = tpu.matmul %32, %34, %cst_32 {dimension_numbers = #tpu.dot_dimension_numbers<[1], [0], [0], [1], [0, 0, 1, 1], [], []>} : vector<128x128xbf16>, vector<128x128xbf16>, vector<128x128xf32> -> vector<128x128xf32>
    %42 = arith.addf %40, %41 : vector<128x128xf32>
    %43 = vector.broadcast %35 : vector<1x128xf32> to vector<128x128xf32>
    %44 = arith.addf %42, %43 : vector<128x128xf32>
    %45 = arith.truncf %44 : vector<128x128xf32> to vector<128x128xbf16>
    %c0_33 = arith.constant 0 : index
    %c0_34 = arith.constant 0 : index
    %46 = vector.load %arg2[%c0_33, %c0_34] : memref<8x128xbf16, #tpu.memory_space<vmem>>, vector<8x128xbf16>
    %cst_35 = arith.constant dense<0.000000e+00> : vector<8x128xf32>
    %47 = tpu.matmul %46, %45, %cst_35 {dimension_numbers = #tpu.dot_dimension_numbers<[1], [0], [0], [1], [0, 0, 1, 1], [], []>} : vector<8x128xbf16>, vector<128x128xbf16>, vector<8x128xf32> -> vector<8x128xf32>
    %c0_36 = arith.constant 0 : index
    %c0_37 = arith.constant 0 : index
    %48 = vector.load %arg3[%c0_36, %c0_37] : memref<8x1xf32, #tpu.memory_space<vmem>>, vector<8x1xf32>
    %49 = vector.broadcast %48 : vector<8x1xf32> to vector<8x128xf32>
    %50 = arith.mulf %47, %49 : vector<8x128xf32>
    %c0_38 = arith.constant 0 : index
    %c0_39 = arith.constant 0 : index
    %51 = vector.load %arg14[%c0_38, %c0_39] : memref<8x128xf32, #tpu.memory_space<vmem>>, vector<8x128xf32>
    tpu.vector_store %arg14[%c0_38, %c0_39], %50 {strides = array<i32>} : memref<8x128xf32, #tpu.memory_space<vmem>>, vector<8x128xf32>,
    return
  }
}

</mosaic_0001>

<llo_original>
// kernel: tpu_custom_call.1
$region0: #{tpu_custom_call.1}
  #allocation0 [shape = 'u32[]', space=smem, size = 0x4, offset = 0x4, fixed_abs, tag = 'smem constant byte address 0x4 - core index']
  #allocation1 [shape = 'u32[144,128]{1,0:T(1,128)}', space=vmem, size = 0x12000, scoped, tag = 'internal scratch']
  %s0 = inlined_call_operand.vmem [shape: bf16[128,128], index: 0, kind: input, shape index: {}]
  %s1 = inlined_call_operand.vmem [shape: f32[128,1], index: 1, kind: input, shape index: {}]
  %s2 = inlined_call_operand.vmem [shape: bf16[8,128], index: 2, kind: input, shape index: {}]
  %s3 = inlined_call_operand.vmem [shape: f32[8,1], index: 3, kind: input, shape index: {}]
  %s4 = inlined_call_operand.vmem [shape: bf16[128,128], index: 4, kind: input, shape index: {}]
  %s5 = inlined_call_operand.hbm [shape: bf16[128,128], index: 5, kind: input, shape index: {}]
  %s6 = inlined_call_operand.hbm [shape: bf16[128,128], index: 6, kind: input, shape index: {}]
  %s7 = inlined_call_operand.vmem [shape: f32[1,128], index: 7, kind: input, shape index: {}]
  %s8 = inlined_call_operand.hbm [shape: bf16[128,128], index: 8, kind: input, shape index: {}]
  %s9 = inlined_call_operand.hbm [shape: bf16[128,128], index: 9, kind: input, shape index: {}]
  %s10 = inlined_call_operand.vmem [shape: f32[1,128], index: 10, kind: input, shape index: {}]
  %s11 = inlined_call_operand.hbm [shape: bf16[128,128], index: 11, kind: input, shape index: {}]
  %s12 = inlined_call_operand.hbm [shape: bf16[128,128], index: 12, kind: input, shape index: {}]
  %s13 = inlined_call_operand.vmem [shape: f32[1,128], index: 13, kind: input, shape index: {}]
  %s14 = inlined_call_operand.hbm [shape: f32[8,128], index: 14, kind: output, shape index: {}]
  %s15 = sld [smem:[#allocation0]]
  $region90: #{tpu_custom_call.1} parent=0
    _
  %s17 = ssub.s32 1, %s15
  %s18 = scalar_select 0, %s17, %s15
  $region1: #{tpu_custom_call.1} parent=0
    #allocation2 [shape = 'u8[32768]{0}', space=vmem, size = 0x8000, scoped, tag = 'input window, operand 5, single buffered']
    #allocation3 [shape = 's32[1]{0}', space=sflag, size = 0x4, scoped, tag = 'scoped memory for tpu_custom_call.1']
    #allocation4 [shape = 's32[1]{0}', space=sflag, size = 0x4, scoped, tag = 'scoped memory for tpu_custom_call.1']
    #allocation5 [shape = 'u8[32768]{0}', space=vmem, size = 0x8000, scoped, tag = 'input window, operand 6, single buffered']
    #allocation6 [shape = 's32[1]{0}', space=sflag, size = 0x4, scoped, tag = 'scoped memory for tpu_custom_call.1']
    #allocation7 [shape = 'u8[32768]{0}', space=vmem, size = 0x8000, scoped, tag = 'input window, operand 8, single buffered']
    #allocation8 [shape = 'u8[32768]{0}', space=vmem, size = 0x8000, scoped, tag = 'input window, operand 9, single buffered']
    #allocation9 [shape = 's32[1]{0}', space=sflag, size = 0x4, scoped, tag = 'scoped memory for tpu_custom_call.1']
    #allocation10 [shape = 'u8[32768]{0}', space=vmem, size = 0x8000, scoped, tag = 'input window, operand 11, single buffered']
    #allocation11 [shape = 'u8[32768]{0}', space=vmem, size = 0x8000, scoped, tag = 'input window, operand 12, single buffered']
    #allocation12 [shape = 's32[1]{0}', space=sflag, size = 0x4, scoped, tag = 'scoped memory for tpu_custom_call.1']
    #allocation13 [shape = 'u8[4096]{0}', space=vmem, size = 0x1000, scoped, tag = 'output window, operand 0, single buffered']
    %19 = vsyncpa [#allocation3], 0
    %20 = vsyncpa [#allocation6], 0
    %21 = vsyncpa [#allocation9], 0
    %22 = vsyncpa [#allocation12], 0
    %23 = vsyncpa [#allocation4], 0
    // Predicated region
    $region2: #{tpu_custom_call.1} parent=1 // pred_check
      _
    $region3: #{tpu_custom_call.1} parent=1 // pred_check_branch
      %25 = sbr.rel (0) target = $region5
    $region4: #{tpu_custom_call.1} parent=1 // pred_region
      _
    $region5: #{tpu_custom_call.1} parent=1 // pred_fallthru
      _
    // Predicated region
    $region6: #{tpu_custom_call.1} parent=1 // pred_check
      _
    $region7: #{tpu_custom_call.1} parent=1 // pred_check_branch
      %27 = sbr.rel (0) target = $region9
    $region8: #{tpu_custom_call.1} parent=1 // pred_region
      _
    $region9: #{tpu_custom_call.1} parent=1 // pred_fallthru
      _
    // Predicated region
    $region10: #{tpu_custom_call.1} parent=1 // pred_check
      _
    $region11: #{tpu_custom_call.1} parent=1 // pred_check_branch
      %29 = sbr.rel (0) target = $region13
    $region12: #{tpu_custom_call.1} parent=1 // pred_region
      _
    $region13: #{tpu_custom_call.1} parent=1 // pred_fallthru
      _
    // Predicated region
    $region14: #{tpu_custom_call.1} parent=1 // pred_check
      _
    $region15: #{tpu_custom_call.1} parent=1 // pred_check_branch
      %31 = sbr.rel (0) target = $region17
    $region16: #{tpu_custom_call.1} parent=1 // pred_region
      _
    $region17: #{tpu_custom_call.1} parent=1 // pred_fallthru
      _
    // Predicated region
    $region18: #{tpu_custom_call.1} parent=1 // pred_check
      _
    $region19: #{tpu_custom_call.1} parent=1 // pred_check_branch
      %33 = sbr.rel (0) target = $region21
    $region20: #{tpu_custom_call.1} parent=1 // pred_region
      _
    $region21: #{tpu_custom_call.1} parent=1 // pred_fallthru
      _
    // Predicated region
    $region22: #{tpu_custom_call.1} parent=1 // pred_check
      _
    $region23: #{tpu_custom_call.1} parent=1 // pred_check_branch
      %35 = sbr.rel (0) target = $region25
    $region24: #{tpu_custom_call.1} parent=1 // pred_region
      %s37 = ssub.s32 1024, 1024
      %38 = vsyncadd [#allocation3], %s37
      %s39 = sshll.u32 [#allocation2], 4
      %s40 = int_to_ptr.vmem [resolvable:$true] %s39
      %45 = dma.hbm_to_vmem [thread:$0]  %s5, 1024, %s40, [#allocation3], 64, 64, 4
    $region25: #{tpu_custom_call.1} parent=1 // pred_fallthru
      _
    // Predicated region
    $region26: #{tpu_custom_call.1} parent=1 // pred_check
      _
    $region27: #{tpu_custom_call.1} parent=1 // pred_check_branch
      %47 = sbr.rel (0) target = $region29
    $region28: #{tpu_custom_call.1} parent=1 // pred_region
      %s49 = ssub.s32 1024, 1024
      %50 = vsyncadd [#allocation6], %s49
      %s51 = sshll.u32 [#allocation5], 4
      %s52 = int_to_ptr.vmem [resolvable:$true] %s51
      %57 = dma.hbm_to_vmem [thread:$0]  %s6, 1024, %s52, [#allocation6], 64, 64, 4
    $region29: #{tpu_custom_call.1} parent=1 // pred_fallthru
      _
    // Predicated region
    $region30: #{tpu_custom_call.1} parent=1 // pred_check
      _
    $region31: #{tpu_custom_call.1} parent=1 // pred_check_branch
      %59 = sbr.rel (0) target = $region33
    $region32: #{tpu_custom_call.1} parent=1 // pred_region
      _
    $region33: #{tpu_custom_call.1} parent=1 // pred_fallthru
      _
    // Predicated region
    $region34: #{tpu_custom_call.1} parent=1 // pred_check
      _
    $region35: #{tpu_custom_call.1} parent=1 // pred_check_branch
      %61 = sbr.rel (0) target = $region37
    $region36: #{tpu_custom_call.1} parent=1 // pred_region
      %s63 = ssub.s32 1024, 1024
      %64 = vsyncadd [#allocation6], %s63
      %s65 = sshll.u32 [#allocation7], 4
      %s66 = int_to_ptr.vmem [resolvable:$true] %s65
      %71 = dma.hbm_to_vmem [thread:$0]  %s8, 1024, %s66, [#allocation6], 64, 64, 4
    $region37: #{tpu_custom_call.1} parent=1 // pred_fallthru
      _
    // Predicated region
    $region38: #{tpu_custom_call.1} parent=1 // pred_check
      _
    $region39: #{tpu_custom_call.1} parent=1 // pred_check_branch
      %73 = sbr.rel (0) target = $region41
    $region40: #{tpu_custom_call.1} parent=1 // pred_region
      %s75 = ssub.s32 1024, 1024
      %76 = vsyncadd [#allocation9], %s75
      %s77 = sshll.u32 [#allocation8], 4
      %s78 = int_to_ptr.vmem [resolvable:$true] %s77
      %83 = dma.hbm_to_vmem [thread:$0]  %s9, 1024, %s78, [#allocation9], 64, 64, 4
    $region41: #{tpu_custom_call.1} parent=1 // pred_fallthru
      _
    // Predicated region
    $region42: #{tpu_custom_call.1} parent=1 // pred_check
      _
    $region43: #{tpu_custom_call.1} parent=1 // pred_check_branch
      %85 = sbr.rel (0) target = $region45
    $region44: #{tpu_custom_call.1} parent=1 // pred_region
      _
    $region45: #{tpu_custom_call.1} parent=1 // pred_fallthru
      _
    // Predicated region
    $region46: #{tpu_custom_call.1} parent=1 // pred_check
      _
    $region47: #{tpu_custom_call.1} parent=1 // pred_check_branch
      %87 = sbr.rel (0) target = $region49
    $region48: #{tpu_custom_call.1} parent=1 // pred_region
      %s89 = ssub.s32 1024, 1024
      %90 = vsyncadd [#allocation9], %s89
      %s91 = sshll.u32 [#allocation10], 4
      %s92 = int_to_ptr.vmem [resolvable:$true] %s91
      %97 = dma.hbm_to_vmem [thread:$0]  %s11, 1024, %s92, [#allocation9], 64, 64, 4
    $region49: #{tpu_custom_call.1} parent=1 // pred_fallthru
      _
    // Predicated region
    $region50: #{tpu_custom_call.1} parent=1 // pred_check
      _
    $region51: #{tpu_custom_call.1} parent=1 // pred_check_branch
      %99 = sbr.rel (0) target = $region53
    $region52: #{tpu_custom_call.1} parent=1 // pred_region
      %s101 = ssub.s32 1024, 1024
      %102 = vsyncadd [#allocation12], %s101
      %s103 = sshll.u32 [#allocation11], 4
      %s104 = int_to_ptr.vmem [resolvable:$true] %s103
      %109 = dma.hbm_to_vmem [thread:$0]  %s12, 1024, %s104, [#allocation12], 64, 64, 4
    $region53: #{tpu_custom_call.1} parent=1 // pred_fallthru
      _
    // Predicated region
    $region54: #{tpu_custom_call.1} parent=1 // pred_check
      _
    $region55: #{tpu_custom_call.1} parent=1 // pred_check_branch
      %111 = sbr.rel (0) target = $region57
    $region56: #{tpu_custom_call.1} parent=1 // pred_region
      _
    $region57: #{tpu_custom_call.1} parent=1 // pred_fallthru
      _
    // Predicated region
    $region58: #{tpu_custom_call.1} parent=1 // pred_check
      _
    $region59: #{tpu_custom_call.1} parent=1 // pred_check_branch
      %113 = sbr.rel (0) target = $region61
    $region60: #{tpu_custom_call.1} parent=1 // pred_region
      %114 = dma.done [#allocation3], 1024
    $region61: #{tpu_custom_call.1} parent=1 // pred_fallthru
      _
    // Predicated region
    $region62: #{tpu_custom_call.1} parent=1 // pred_check
      _
    $region63: #{tpu_custom_call.1} parent=1 // pred_check_branch
      %116 = sbr.rel (0) target = $region65
    $region64: #{tpu_custom_call.1} parent=1 // pred_region
      %117 = dma.done [#allocation6], 1024
    $region65: #{tpu_custom_call.1} parent=1 // pred_fallthru
      _
    // Predicated region
    $region66: #{tpu_custom_call.1} parent=1 // pred_check
      _
    $region67: #{tpu_custom_call.1} parent=1 // pred_check_branch
      %119 = sbr.rel (0) target = $region69
    $region68: #{tpu_custom_call.1} parent=1 // pred_region
      %120 = dma.done [#allocation6], 1024
    $region69: #{tpu_custom_call.1} parent=1 // pred_fallthru
      _
    // Predicated region
    $region70: #{tpu_custom_call.1} parent=1 // pred_check
      _
    $region71: #{tpu_custom_call.1} parent=1 // pred_check_branch
      %122 = sbr.rel (0) target = $region73
    $region72: #{tpu_custom_call.1} parent=1 // pred_region
      %123 = dma.done [#allocation9], 1024
    $region73: #{tpu_custom_call.1} parent=1 // pred_fallthru
      _
    // Predicated region
    $region74: #{tpu_custom_call.1} parent=1 // pred_check
      _
    $region75: #{tpu_custom_call.1} parent=1 // pred_check_branch
      %125 = sbr.rel (0) target = $region77
    $region76: #{tpu_custom_call.1} parent=1 // pred_region
      %126 = dma.done [#allocation9], 1024
    $region77: #{tpu_custom_call.1} parent=1 // pred_fallthru
      _
    // Predicated region
    $region78: #{tpu_custom_call.1} parent=1 // pred_check
      _
    $region79: #{tpu_custom_call.1} parent=1 // pred_check_branch
      %128 = sbr.rel (0) target = $region81
    $region80: #{tpu_custom_call.1} parent=1 // pred_region
      %129 = dma.done [#allocation12], 1024
    $region81: #{tpu_custom_call.1} parent=1 // pred_fallthru
      _
    %v131 = vld [vmem:[%s0] sm:$0xf]
    %v132 = vld [vmem:[%s0 + $0x4] sm:$0xf]
    %v133 = vld [vmem:[%s0 + $0x8] sm:$0xf]
    %v134 = vld [vmem:[%s0 + $0xc] sm:$0xf]
    %v135 = vld [vmem:[%s0 + $0x10] sm:$0xf]
    %v136 = vld [vmem:[%s0 + $0x14] sm:$0xf]
    %v137 = vld [vmem:[%s0 + $0x18] sm:$0xf]
    %v138 = vld [vmem:[%s0 + $0x1c] sm:$0xf]
    %v139 = vld [vmem:[%s0 + $0x20] sm:$0xf]
    %v140 = vld [vmem:[%s0 + $0x24] sm:$0xf]
    %v141 = vld [vmem:[%s0 + $0x28] sm:$0xf]
    %v142 = vld [vmem:[%s0 + $0x2c] sm:$0xf]
    %v143 = vld [vmem:[%s0 + $0x30] sm:$0xf]
    %v144 = vld [vmem:[%s0 + $0x34] sm:$0xf]
    %v145 = vld [vmem:[%s0 + $0x38] sm:$0xf]
    %v146 = vld [vmem:[%s0 + $0x3c] sm:$0xf]
    %v147 = vld [vmem:[%s1] sm:$0xff]
    %v148 = vld [vmem:[%s1 + $0x8] sm:$0xff]
    %v149 = vld [vmem:[%s1 + $0x10] sm:$0xff]
    %v150 = vld [vmem:[%s1 + $0x18] sm:$0xff]
    %v151 = vld [vmem:[%s1 + $0x20] sm:$0xff]
    %v152 = vld [vmem:[%s1 + $0x28] sm:$0xff]
    %v153 = vld [vmem:[%s1 + $0x30] sm:$0xff]
    %v154 = vld [vmem:[%s1 + $0x38] sm:$0xff]
    %v155 = vld [vmem:[%s1 + $0x40] sm:$0xff]
    %v156 = vld [vmem:[%s1 + $0x48] sm:$0xff]
    %v157 = vld [vmem:[%s1 + $0x50] sm:$0xff]
    %v158 = vld [vmem:[%s1 + $0x58] sm:$0xff]
    %v159 = vld [vmem:[%s1 + $0x60] sm:$0xff]
    %v160 = vld [vmem:[%s1 + $0x68] sm:$0xff]
    %v161 = vld [vmem:[%s1 + $0x70] sm:$0xff]
    %v162 = vld [vmem:[%s1 + $0x78] sm:$0xff]
    %v163 = vld [vmem:[%s4] sm:$0xf]
    %v164 = vld [vmem:[%s4 + $0x4] sm:$0xf]
    %v165 = vld [vmem:[%s4 + $0x8] sm:$0xf]
    %v166 = vld [vmem:[%s4 + $0xc] sm:$0xf]
    %v167 = vld [vmem:[%s4 + $0x10] sm:$0xf]
    %v168 = vld [vmem:[%s4 + $0x14] sm:$0xf]
    %v169 = vld [vmem:[%s4 + $0x18] sm:$0xf]
    %v170 = vld [vmem:[%s4 + $0x1c] sm:$0xf]
    %v171 = vld [vmem:[%s4 + $0x20] sm:$0xf]
    %v172 = vld [vmem:[%s4 + $0x24] sm:$0xf]
    %v173 = vld [vmem:[%s4 + $0x28] sm:$0xf]
    %v174 = vld [vmem:[%s4 + $0x2c] sm:$0xf]
    %v175 = vld [vmem:[%s4 + $0x30] sm:$0xf]
    %v176 = vld [vmem:[%s4 + $0x34] sm:$0xf]
    %v177 = vld [vmem:[%s4 + $0x38] sm:$0xf]
    %v178 = vld [vmem:[%s4 + $0x3c] sm:$0xf]
    %v179 = vld [vmem:[#allocation2] sm:$0xf]
    %v180 = vld [vmem:[#allocation2 + $0x4] sm:$0xf]
    %v181 = vld [vmem:[#allocation2 + $0x8] sm:$0xf]
    %v182 = vld [vmem:[#allocation2 + $0xc] sm:$0xf]
    %v183 = vld [vmem:[#allocation2 + $0x10] sm:$0xf]
    %v184 = vld [vmem:[#allocation2 + $0x14] sm:$0xf]
    %v185 = vld [vmem:[#allocation2 + $0x18] sm:$0xf]
    %v186 = vld [vmem:[#allocation2 + $0x1c] sm:$0xf]
    %v187 = vld [vmem:[#allocation2 + $0x20] sm:$0xf]
    %v188 = vld [vmem:[#allocation2 + $0x24] sm:$0xf]
    %v189 = vld [vmem:[#allocation2 + $0x28] sm:$0xf]
    %v190 = vld [vmem:[#allocation2 + $0x2c] sm:$0xf]
    %v191 = vld [vmem:[#allocation2 + $0x30] sm:$0xf]
    %v192 = vld [vmem:[#allocation2 + $0x34] sm:$0xf]
    %v193 = vld [vmem:[#allocation2 + $0x38] sm:$0xf]
    %v194 = vld [vmem:[#allocation2 + $0x3c] sm:$0xf]
    %v195 = vld [vmem:[#allocation5] sm:$0xf]
    %v196 = vld [vmem:[#allocation5 + $0x4] sm:$0xf]
    %v197 = vld [vmem:[#allocation5 + $0x8] sm:$0xf]
    %v198 = vld [vmem:[#allocation5 + $0xc] sm:$0xf]
    %v199 = vld [vmem:[#allocation5 + $0x10] sm:$0xf]
    %v200 = vld [vmem:[#allocation5 + $0x14] sm:$0xf]
    %v201 = vld [vmem:[#allocation5 + $0x18] sm:$0xf]
    %v202 = vld [vmem:[#allocation5 + $0x1c] sm:$0xf]
    %v203 = vld [vmem:[#allocation5 + $0x20] sm:$0xf]
    %v204 = vld [vmem:[#allocation5 + $0x24] sm:$0xf]
    %v205 = vld [vmem:[#allocation5 + $0x28] sm:$0xf]
    %v206 = vld [vmem:[#allocation5 + $0x2c] sm:$0xf]
    %v207 = vld [vmem:[#allocation5 + $0x30] sm:$0xf]
    %v208 = vld [vmem:[#allocation5 + $0x34] sm:$0xf]
    %v209 = vld [vmem:[#allocation5 + $0x38] sm:$0xf]
    %v210 = vld [vmem:[#allocation5 + $0x3c] sm:$0xf]
    %v211 = vld [vmem:[%s7] sm:$0x1]
    %v228 = vunpack.c.l.b16 %v131
    %v229 = vunpack.c.l.b16 %v132
    %v230 = vunpack.c.l.b16 %v133
    %v231 = vunpack.c.l.b16 %v134
    %v232 = vunpack.c.l.b16 %v135
    %v233 = vunpack.c.l.b16 %v136
    %v234 = vunpack.c.l.b16 %v137
    %v235 = vunpack.c.l.b16 %v138
    %v236 = vunpack.c.l.b16 %v139
    %v237 = vunpack.c.l.b16 %v140
    %v238 = vunpack.c.l.b16 %v141
    %v239 = vunpack.c.l.b16 %v142
    %v240 = vunpack.c.l.b16 %v143
    %v241 = vunpack.c.l.b16 %v144
    %v242 = vunpack.c.l.b16 %v145
    %v243 = vunpack.c.l.b16 %v146
    %v244 = vpack.c.b16 %v229, %v228
    %v245 = vpack.c.b16 %v231, %v230
    %v246 = vpack.c.b16 %v233, %v232
    %v247 = vpack.c.b16 %v235, %v234
    %v248 = vpack.c.b16 %v237, %v236
    %v249 = vpack.c.b16 %v239, %v238
    %v250 = vpack.c.b16 %v241, %v240
    %v251 = vpack.c.b16 %v243, %v242
    %v276 = vunpack.c.l.b16 %v163
    %v277 = vunpack.c.l.b16 %v164
    %v278 = vunpack.c.l.b16 %v165
    %v279 = vunpack.c.l.b16 %v166
    %v280 = vunpack.c.l.b16 %v167
    %v281 = vunpack.c.l.b16 %v168
    %v282 = vunpack.c.l.b16 %v169
    %v283 = vunpack.c.l.b16 %v170
    %v284 = vunpack.c.l.b16 %v171
    %v285 = vunpack.c.l.b16 %v172
    %v286 = vunpack.c.l.b16 %v173
    %v287 = vunpack.c.l.b16 %v174
    %v288 = vunpack.c.l.b16 %v175
    %v289 = vunpack.c.l.b16 %v176
    %v290 = vunpack.c.l.b16 %v177
    %v291 = vunpack.c.l.b16 %v178
    %v292 = vpack.c.b16 %v277, %v276
    %v293 = vpack.c.b16 %v279, %v278
    %v294 = vpack.c.b16 %v281, %v280
    %v295 = vpack.c.b16 %v283, %v282
    %v296 = vpack.c.b16 %v285, %v284
    %v297 = vpack.c.b16 %v287, %v286
    %v298 = vpack.c.b16 %v289, %v288
    %v299 = vpack.c.b16 %v291, %v290
    %308 = vmatprep.subr.bf16.mxu0 0
    %309 = vmatpush1.bf16.msra.mxu0 %v292
    %310 = vmatprep.subr.bf16.mxu0 0
    %311 = vmatpush1.bf16.msra.mxu0 %v293
    %312 = vmatprep.subr.bf16.mxu0 0
    %313 = vmatpush1.bf16.msra.mxu0 %v294
    %314 = vmatprep.subr.bf16.mxu0 0
    %315 = vmatpush1.bf16.msra.mxu0 %v295
    %316 = vmatprep.subr.bf16.mxu0 0
    %317 = vmatpush1.bf16.msra.mxu0 %v296
    %318 = vmatprep.subr.bf16.mxu0 0
    %319 = vmatpush1.bf16.msra.mxu0 %v297
    %320 = vmatprep.subr.bf16.mxu0 0
    %321 = vmatpush1.bf16.msra.mxu0 %v298
    %322 = vmatprep.subr.bf16.mxu0 0
    %323 = vmatpush1.bf16.msra.mxu0 %v299
    %324 = vmatprep.subr.bf16.mxu0 0
    %325 = vmatpush1.bf16.msra.mxu0 0
    %326 = vmatprep.subr.bf16.mxu0 0
    %327 = vmatpush1.bf16.msra.mxu0 0
    %328 = vmatprep.subr.bf16.mxu0 0
    %329 = vmatpush1.bf16.msra.mxu0 0
    %330 = vmatprep.subr.bf16.mxu0 0
    %331 = vmatpush1.bf16.msra.mxu0 0
    %332 = vmatprep.subr.bf16.mxu0 0
    %333 = vmatpush1.bf16.msra.mxu0 0
    %334 = vmatprep.subr.bf16.mxu0 0
    %335 = vmatpush1.bf16.msra.mxu0 0
    %336 = vmatprep.subr.bf16.mxu0 0
    %337 = vmatpush1.bf16.msra.mxu0 0
    %338 = vmatprep.subr.bf16.mxu0 0
    %339 = vmatpush1.bf16.msra.mxu0 0
    %340 = vmatprep.mubr.bf16.mxu0 0
    %341 = vmatmul.mubr.bf16.gmra.mrb[0].mxu0 %v244
    %v342 = vpop.f32.mrb[0].mxu0
    %v343 = vadd.f32 0.0, %v342
    %v344 = vpop.f32.mrb[0].mxu0
    %v345 = vpop.f32.mrb[0].mxu0
    %v346 = vadd.f32 0.0, %v345
    %v347 = vpop.f32.mrb[0].mxu0
    %348 = vmatprep.mubr.bf16.mxu0 0
    %349 = vmatmul.mubr.bf16.gmra.mrb[0].mxu0 %v245
    %v350 = vpop.f32.mrb[0].mxu0
    %v351 = vadd.f32 0.0, %v350
    %v352 = vpop.f32.mrb[0].mxu0
    %v353 = vpop.f32.mrb[0].mxu0
    %v354 = vadd.f32 0.0, %v353
    %v355 = vpop.f32.mrb[0].mxu0
    %356 = vmatprep.mubr.bf16.mxu0 0
    %357 = vmatmul.mubr.bf16.gmra.mrb[0].mxu0 %v246
    %v358 = vpop.f32.mrb[0].mxu0
    %v359 = vadd.f32 0.0, %v358
    %v360 = vpop.f32.mrb[0].mxu0
    %v361 = vpop.f32.mrb[0].mxu0
    %v362 = vadd.f32 0.0, %v361
    %v363 = vpop.f32.mrb[0].mxu0
    %364 = vmatprep.mubr.bf16.mxu0 0
    %365 = vmatmul.mubr.bf16.gmra.mrb[0].mxu0 %v247
    %v366 = vpop.f32.mrb[0].mxu0
    %v367 = vadd.f32 0.0, %v366
    %v368 = vpop.f32.mrb[0].mxu0
    %v369 = vpop.f32.mrb[0].mxu0
    %v370 = vadd.f32 0.0, %v369
    %v371 = vpop.f32.mrb[0].mxu0
    %372 = vmatprep.mubr.bf16.mxu0 0
    %373 = vmatmul.mubr.bf16.gmra.mrb[0].mxu0 %v248
    %v374 = vpop.f32.mrb[0].mxu0
    %v375 = vadd.f32 0.0, %v374
    %v376 = vpop.f32.mrb[0].mxu0
    %v377 = vpop.f32.mrb[0].mxu0
    %v378 = vadd.f32 0.0, %v377
    %v379 = vpop.f32.mrb[0].mxu0
    %380 = vmatprep.mubr.bf16.mxu0 0
    %381 = vmatmul.mubr.bf16.gmra.mrb[0].mxu0 %v249
    %v382 = vpop.f32.mrb[0].mxu0
    %v383 = vadd.f32 0.0, %v382
    %v384 = vpop.f32.mrb[0].mxu0
    %v385 = vpop.f32.mrb[0].mxu0
    %v386 = vadd.f32 0.0, %v385
    %v387 = vpop.f32.mrb[0].mxu0
    %388 = vmatprep.mubr.bf16.mxu0 0
    %389 = vmatmul.mubr.bf16.gmra.mrb[0].mxu0 %v250
    %v390 = vpop.f32.mrb[0].mxu0
    %v391 = vadd.f32 0.0, %v390
    %v392 = vpop.f32.mrb[0].mxu0
    %v393 = vpop.f32.mrb[0].mxu0
    %v394 = vadd.f32 0.0, %v393
    %v395 = vpop.f32.mrb[0].mxu0
    %396 = vmatprep.mubr.bf16.mxu0 0
    %397 = vmatmul.mubr.bf16.gmra.mrb[0].mxu0 %v251
    %v398 = vpop.f32.mrb[0].mxu0
    %v399 = vadd.f32 0.0, %v398
    %v400 = vpop.f32.mrb[0].mxu0
    %v401 = vpop.f32.mrb[0].mxu0
    %v402 = vadd.f32 0.0, %v401
    %v403 = vpop.f32.mrb[0].mxu0
    %404 = vdwg.mxu0
    %406 = vset.pattern.permute.xlu0 0
    %407 = vperm.xlu0 %406, %v147
    %v408 = vpop.permute.xlu0 %407
    %411 = vset.pattern.permute.xlu0 0
    %412 = vperm.xlu0 %411, %v148
    %v413 = vpop.permute.xlu0 %412
    %416 = vset.pattern.permute.xlu0 0
    %417 = vperm.xlu0 %416, %v149
    %v418 = vpop.permute.xlu0 %417
    %421 = vset.pattern.permute.xlu0 0
    %422 = vperm.xlu0 %421, %v150
    %v423 = vpop.permute.xlu0 %422
    %426 = vset.pattern.permute.xlu0 0
    %427 = vperm.xlu0 %426, %v151
    %v428 = vpop.permute.xlu0 %427
    %431 = vset.pattern.permute.xlu0 0
    %432 = vperm.xlu0 %431, %v152
    %v433 = vpop.permute.xlu0 %432
    %436 = vset.pattern.permute.xlu0 0
    %437 = vperm.xlu0 %436, %v153
    %v438 = vpop.permute.xlu0 %437
    %441 = vset.pattern.permute.xlu0 0
    %442 = vperm.xlu0 %441, %v154
    %v443 = vpop.permute.xlu0 %442
    %446 = vset.pattern.permute.xlu0 0
    %447 = vperm.xlu0 %446, %v155
    %v448 = vpop.permute.xlu0 %447
    %451 = vset.pattern.permute.xlu0 0
    %452 = vperm.xlu0 %451, %v156
    %v453 = vpop.permute.xlu0 %452
    %456 = vset.pattern.permute.xlu0 0
    %457 = vperm.xlu0 %456, %v157
    %v458 = vpop.permute.xlu0 %457
    %461 = vset.pattern.permute.xlu0 0
    %462 = vperm.xlu0 %461, %v158
    %v463 = vpop.permute.xlu0 %462
    %466 = vset.pattern.permute.xlu0 0
    %467 = vperm.xlu0 %466, %v159
    %v468 = vpop.permute.xlu0 %467
    %471 = vset.pattern.permute.xlu0 0
    %472 = vperm.xlu0 %471, %v160
    %v473 = vpop.permute.xlu0 %472
    %476 = vset.pattern.permute.xlu0 0
    %477 = vperm.xlu0 %476, %v161
    %v478 = vpop.permute.xlu0 %477
    %481 = vset.pattern.permute.xlu0 0
    %482 = vperm.xlu0 %481, %v162
    %v483 = vpop.permute.xlu0 %482
    %v485 = vmul.f32 %v343, %v408
    %v486 = vmul.f32 %v346, %v413
    %v487 = vmul.f32 %v351, %v418
    %v488 = vmul.f32 %v354, %v423
    %v489 = vmul.f32 %v359, %v428
    %v490 = vmul.f32 %v362, %v433
    %v491 = vmul.f32 %v367, %v438
    %v492 = vmul.f32 %v370, %v443
    %v493 = vmul.f32 %v375, %v448
    %v494 = vmul.f32 %v378, %v453
    %v495 = vmul.f32 %v383, %v458
    %v496 = vmul.f32 %v386, %v463
    %v497 = vmul.f32 %v391, %v468
    %v498 = vmul.f32 %v394, %v473
    %v499 = vmul.f32 %v399, %v478
    %v500 = vmul.f32 %v402, %v483
    %v501 = vpack.c.bf16 %v486, %v485
    %v502 = vpack.c.bf16 %v488, %v487
    %v503 = vpack.c.bf16 %v490, %v489
    %v504 = vpack.c.bf16 %v492, %v491
    %v505 = vpack.c.bf16 %v494, %v493
    %v506 = vpack.c.bf16 %v496, %v495
    %v507 = vpack.c.bf16 %v498, %v497
    %v508 = vpack.c.bf16 %v500, %v499
    %v525 = vunpack.c.l.b16 %v195
    %v526 = vunpack.c.l.b16 %v196
    %v527 = vunpack.c.l.b16 %v197
    %v528 = vunpack.c.l.b16 %v198
    %v529 = vunpack.c.l.b16 %v199
    %v530 = vunpack.c.l.b16 %v200
    %v531 = vunpack.c.l.b16 %v201
    %v532 = vunpack.c.l.b16 %v202
    %v533 = vunpack.c.l.b16 %v203
    %v534 = vunpack.c.l.b16 %v204
    %v535 = vunpack.c.l.b16 %v205
    %v536 = vunpack.c.l.b16 %v206
    %v537 = vunpack.c.l.b16 %v207
    %v538 = vunpack.c.l.b16 %v208
    %v539 = vunpack.c.l.b16 %v209
    %v540 = vunpack.c.l.b16 %v210
    %v541 = vpack.c.b16 %v526, %v525
    %v542 = vpack.c.b16 %v528, %v527
    %v543 = vpack.c.b16 %v530, %v529
    %v544 = vpack.c.b16 %v532, %v531
    %v545 = vpack.c.b16 %v534, %v533
    %v546 = vpack.c.b16 %v536, %v535
    %v547 = vpack.c.b16 %v538, %v537
    %v548 = vpack.c.b16 %v540, %v539
    %557 = vmatprep.subr.bf16.mxu0 0
    %558 = vmatpush1.bf16.msra.mxu0 %v541
    %559 = vmatprep.subr.bf16.mxu0 0
    %560 = vmatpush1.bf16.msra.mxu0 %v542
    %561 = vmatprep.subr.bf16.mxu0 0
    %562 = vmatpush1.bf16.msra.mxu0 %v543
    %563 = vmatprep.subr.bf16.mxu0 0
    %564 = vmatpush1.bf16.msra.mxu0 %v544
    %565 = vmatprep.subr.bf16.mxu0 0
    %566 = vmatpush1.bf16.msra.mxu0 %v545
    %567 = vmatprep.subr.bf16.mxu0 0
    %568 = vmatpush1.bf16.msra.mxu0 %v546
    %569 = vmatprep.subr.bf16.mxu0 0
    %570 = vmatpush1.bf16.msra.mxu0 %v547
    %571 = vmatprep.subr.bf16.mxu0 0
    %572 = vmatpush1.bf16.msra.mxu0 %v548
    %573 = vmatprep.subr.bf16.mxu0 0
    %574 = vmatpush1.bf16.msra.mxu0 0
    %575 = vmatprep.subr.bf16.mxu0 0
    %576 = vmatpush1.bf16.msra.mxu0 0
    %577 = vmatprep.subr.bf16.mxu0 0
    %578 = vmatpush1.bf16.msra.mxu0 0
    %579 = vmatprep.subr.bf16.mxu0 0
    %580 = vmatpush1.bf16.msra.mxu0 0
    %581 = vmatprep.subr.bf16.mxu0 0
    %582 = vmatpush1.bf16.msra.mxu0 0
    %583 = vmatprep.subr.bf16.mxu0 0
    %584 = vmatpush1.bf16.msra.mxu0 0
    %585 = vmatprep.subr.bf16.mxu0 0
    %586 = vmatpush1.bf16.msra.mxu0 0
    %587 = vmatprep.subr.bf16.mxu0 0
    %588 = vmatpush1.bf16.msra.mxu0 0
    %589 = vmatprep.mubr.bf16.mxu0 0
    %590 = vmatmul.mubr.bf16.gmra.mrb[0].mxu0 %v292
    %v591 = vpop.f32.mrb[0].mxu0
    %v592 = vadd.f32 0.0, %v591
    %v593 = vpop.f32.mrb[0].mxu0
    %v594 = vpop.f32.mrb[0].mxu0
    %v595 = vadd.f32 0.0, %v594
    %v596 = vpop.f32.mrb[0].mxu0
    %597 = vmatprep.mubr.bf16.mxu0 0
    %598 = vmatmul.mubr.bf16.gmra.mrb[0].mxu0 %v293
    %v599 = vpop.f32.mrb[0].mxu0
    %v600 = vadd.f32 0.0, %v599
    %v601 = vpop.f32.mrb[0].mxu0
    %v602 = vpop.f32.mrb[0].mxu0
    %v603 = vadd.f32 0.0, %v602
    %v604 = vpop.f32.mrb[0].mxu0
    %605 = vmatprep.mubr.bf16.mxu0 0
    %606 = vmatmul.mubr.bf16.gmra.mrb[0].mxu0 %v294
    %v607 = vpop.f32.mrb[0].mxu0
    %v608 = vadd.f32 0.0, %v607
    %v609 = vpop.f32.mrb[0].mxu0
    %v610 = vpop.f32.mrb[0].mxu0
    %v611 = vadd.f32 0.0, %v610
    %v612 = vpop.f32.mrb[0].mxu0
    %613 = vmatprep.mubr.bf16.mxu0 0
    %614 = vmatmul.mubr.bf16.gmra.mrb[0].mxu0 %v295
    %v615 = vpop.f32.mrb[0].mxu0
    %v616 = vadd.f32 0.0, %v615
    %v617 = vpop.f32.mrb[0].mxu0
    %v618 = vpop.f32.mrb[0].mxu0
    %v619 = vadd.f32 0.0, %v618
    %v620 = vpop.f32.mrb[0].mxu0
    %621 = vmatprep.mubr.bf16.mxu0 0
    %622 = vmatmul.mubr.bf16.gmra.mrb[0].mxu0 %v296
    %v623 = vpop.f32.mrb[0].mxu0
    %v624 = vadd.f32 0.0, %v623
    %v625 = vpop.f32.mrb[0].mxu0
    %v626 = vpop.f32.mrb[0].mxu0
    %v627 = vadd.f32 0.0, %v626
    %v628 = vpop.f32.mrb[0].mxu0
    %629 = vmatprep.mubr.bf16.mxu0 0
    %630 = vmatmul.mubr.bf16.gmra.mrb[0].mxu0 %v297
    %v631 = vpop.f32.mrb[0].mxu0
    %v632 = vadd.f32 0.0, %v631
    %v633 = vpop.f32.mrb[0].mxu0
    %v634 = vpop.f32.mrb[0].mxu0
    %v635 = vadd.f32 0.0, %v634
    %v636 = vpop.f32.mrb[0].mxu0
    %637 = vmatprep.mubr.bf16.mxu0 0
    %638 = vmatmul.mubr.bf16.gmra.mrb[0].mxu0 %v298
    %v639 = vpop.f32.mrb[0].mxu0
    %v640 = vadd.f32 0.0, %v639
    %v641 = vpop.f32.mrb[0].mxu0
    %v642 = vpop.f32.mrb[0].mxu0
    %v643 = vadd.f32 0.0, %v642
    %v644 = vpop.f32.mrb[0].mxu0
    %645 = vmatprep.mubr.bf16.mxu0 0
    %646 = vmatmul.mubr.bf16.gmra.mrb[0].mxu0 %v299
    %v647 = vpop.f32.mrb[0].mxu0
    %v648 = vadd.f32 0.0, %v647
    %v649 = vpop.f32.mrb[0].mxu0
    %v650 = vpop.f32.mrb[0].mxu0
    %v651 = vadd.f32 0.0, %v650
    %v652 = vpop.f32.mrb[0].mxu0
    %653 = vdwg.mxu0
    %v670 = vunpack.c.l.b16 %v179
    %v671 = vunpack.c.l.b16 %v180
    %v672 = vunpack.c.l.b16 %v181
    %v673 = vunpack.c.l.b16 %v182
    %v674 = vunpack.c.l.b16 %v183
    %v675 = vunpack.c.l.b16 %v184
    %v676 = vunpack.c.l.b16 %v185
    %v677 = vunpack.c.l.b16 %v186
    %v678 = vunpack.c.l.b16 %v187
    %v679 = vunpack.c.l.b16 %v188
    %v680 = vunpack.c.l.b16 %v189
    %v681 = vunpack.c.l.b16 %v190
    %v682 = vunpack.c.l.b16 %v191
    %v683 = vunpack.c.l.b16 %v192
    %v684 = vunpack.c.l.b16 %v193
    %v685 = vunpack.c.l.b16 %v194
    %v686 = vpack.c.b16 %v671, %v670
    %v687 = vpack.c.b16 %v673, %v672
    %v688 = vpack.c.b16 %v675, %v674
    %v689 = vpack.c.b16 %v677, %v676
    %v690 = vpack.c.b16 %v679, %v678
    %v691 = vpack.c.b16 %v681, %v680
    %v692 = vpack.c.b16 %v683, %v682
    %v693 = vpack.c.b16 %v685, %v684
    %702 = vmatprep.subr.bf16.mxu0 0
    %703 = vmatpush1.bf16.msra.mxu0 %v686
    %704 = vmatprep.subr.bf16.mxu0 0
    %705 = vmatpush1.bf16.msra.mxu0 %v687
    %706 = vmatprep.subr.bf16.mxu0 0
    %707 = vmatpush1.bf16.msra.mxu0 %v688
    %708 = vmatprep.subr.bf16.mxu0 0
    %709 = vmatpush1.bf16.msra.mxu0 %v689
    %710 = vmatprep.subr.bf16.mxu0 0
    %711 = vmatpush1.bf16.msra.mxu0 %v690
    %712 = vmatprep.subr.bf16.mxu0 0
    %713 = vmatpush1.bf16.msra.mxu0 %v691
    %714 = vmatprep.subr.bf16.mxu0 0
    %715 = vmatpush1.bf16.msra.mxu0 %v692
    %716 = vmatprep.subr.bf16.mxu0 0
    %717 = vmatpush1.bf16.msra.mxu0 %v693
    %718 = vmatprep.subr.bf16.mxu0 0
    %719 = vmatpush1.bf16.msra.mxu0 0
    %720 = vmatprep.subr.bf16.mxu0 0
    %721 = vmatpush1.bf16.msra.mxu0 0
    %722 = vmatprep.subr.bf16.mxu0 0
    %723 = vmatpush1.bf16.msra.mxu0 0
    %724 = vmatprep.subr.bf16.mxu0 0
    %725 = vmatpush1.bf16.msra.mxu0 0
    %726 = vmatprep.subr.bf16.mxu0 0
    %727 = vmatpush1.bf16.msra.mxu0 0
    %728 = vmatprep.subr.bf16.mxu0 0
    %729 = vmatpush1.bf16.msra.mxu0 0
    %730 = vmatprep.subr.bf16.mxu0 0
    %731 = vmatpush1.bf16.msra.mxu0 0
    %732 = vmatprep.subr.bf16.mxu0 0
    %733 = vmatpush1.bf16.msra.mxu0 0
    %734 = vmatprep.mubr.bf16.mxu0 0
    %735 = vmatmul.mubr.bf16.gmra.mrb[0].mxu0 %v501
    %v736 = vpop.f32.mrb[0].mxu0
    %v737 = vadd.f32 %v592, %v736
    %v738 = vpop.f32.mrb[0].mxu0
    %v739 = vpop.f32.mrb[0].mxu0
    %v740 = vadd.f32 %v595, %v739
    %v741 = vpop.f32.mrb[0].mxu0
    %742 = vmatprep.mubr.bf16.mxu0 0
    %743 = vmatmul.mubr.bf16.gmra.mrb[0].mxu0 %v502
    %v744 = vpop.f32.mrb[0].mxu0
    %v745 = vadd.f32 %v600, %v744
    %v746 = vpop.f32.mrb[0].mxu0
    %v747 = vpop.f32.mrb[0].mxu0
    %v748 = vadd.f32 %v603, %v747
    %v749 = vpop.f32.mrb[0].mxu0
    %750 = vmatprep.mubr.bf16.mxu0 0
    %751 = vmatmul.mubr.bf16.gmra.mrb[0].mxu0 %v503
    %v752 = vpop.f32.mrb[0].mxu0
    %v753 = vadd.f32 %v608, %v752
    %v754 = vpop.f32.mrb[0].mxu0
    %v755 = vpop.f32.mrb[0].mxu0
    %v756 = vadd.f32 %v611, %v755
    %v757 = vpop.f32.mrb[0].mxu0
    %758 = vmatprep.mubr.bf16.mxu0 0
    %759 = vmatmul.mubr.bf16.gmra.mrb[0].mxu0 %v504
    %v760 = vpop.f32.mrb[0].mxu0
    %v761 = vadd.f32 %v616, %v760
    %v762 = vpop.f32.mrb[0].mxu0
    %v763 = vpop.f32.mrb[0].mxu0
    %v764 = vadd.f32 %v619, %v763
    %v765 = vpop.f32.mrb[0].mxu0
    %766 = vmatprep.mubr.bf16.mxu0 0
    %767 = vmatmul.mubr.bf16.gmra.mrb[0].mxu0 %v505
    %v768 = vpop.f32.mrb[0].mxu0
    %v769 = vadd.f32 %v624, %v768
    %v770 = vpop.f32.mrb[0].mxu0
    %v771 = vpop.f32.mrb[0].mxu0
    %v772 = vadd.f32 %v627, %v771
    %v773 = vpop.f32.mrb[0].mxu0
    %774 = vmatprep.mubr.bf16.mxu0 0
    %775 = vmatmul.mubr.bf16.gmra.mrb[0].mxu0 %v506
    %v776 = vpop.f32.mrb[0].mxu0
    %v777 = vadd.f32 %v632, %v776
    %v778 = vpop.f32.mrb[0].mxu0
    %v779 = vpop.f32.mrb[0].mxu0
    %v780 = vadd.f32 %v635, %v779
    %v781 = vpop.f32.mrb[0].mxu0
    %782 = vmatprep.mubr.bf16.mxu0 0
    %783 = vmatmul.mubr.bf16.gmra.mrb[0].mxu0 %v507
    %v784 = vpop.f32.mrb[0].mxu0
    %v785 = vadd.f32 %v640, %v784
    %v786 = vpop.f32.mrb[0].mxu0
    %v787 = vpop.f32.mrb[0].mxu0
    %v788 = vadd.f32 %v643, %v787
    %v789 = vpop.f32.mrb[0].mxu0
    %790 = vmatprep.mubr.bf16.mxu0 0
    %791 = vmatmul.mubr.bf16.gmra.mrb[0].mxu0 %v508
    %v792 = vpop.f32.mrb[0].mxu0
    %v793 = vadd.f32 %v648, %v792
    %v794 = vpop.f32.mrb[0].mxu0
    %v795 = vpop.f32.mrb[0].mxu0
    %v796 = vadd.f32 %v651, %v795
    %v797 = vpop.f32.mrb[0].mxu0
    %798 = vdwg.mxu0
    %v800 = vlaneseq
    %v801 = vshrl.u32 %v800, 7
    %v802 = vsub.s32 0, %v801
    %v803 = vrot.slane %v211, %v802
    %v805 = vadd.f32 %v737, %v803
    %v806 = vadd.f32 %v740, %v803
    %v807 = vadd.f32 %v745, %v803
    %v808 = vadd.f32 %v748, %v803
    %v809 = vadd.f32 %v753, %v803
    %v810 = vadd.f32 %v756, %v803
    %v811 = vadd.f32 %v761, %v803
    %v812 = vadd.f32 %v764, %v803
    %v813 = vadd.f32 %v769, %v803
    %v814 = vadd.f32 %v772, %v803
    %v815 = vadd.f32 %v777, %v803
    %v816 = vadd.f32 %v780, %v803
    %v817 = vadd.f32 %v785, %v803
    %v818 = vadd.f32 %v788, %v803
    %v819 = vadd.f32 %v793, %v803
    %v820 = vadd.f32 %v796, %v803
    %v821 = vmax.f32 %v805, 0.0
    %v822 = vmax.f32 %v806, 0.0
    %v823 = vmax.f32 %v807, 0.0
    %v824 = vmax.f32 %v808, 0.0
    %v825 = vmax.f32 %v809, 0.0
    %v826 = vmax.f32 %v810, 0.0
    %v827 = vmax.f32 %v811, 0.0
    %v828 = vmax.f32 %v812, 0.0
    %v829 = vmax.f32 %v813, 0.0
    %v830 = vmax.f32 %v814, 0.0
    %v831 = vmax.f32 %v815, 0.0
    %v832 = vmax.f32 %v816, 0.0
    %v833 = vmax.f32 %v817, 0.0
    %v834 = vmax.f32 %v818, 0.0
    %v835 = vmax.f32 %v819, 0.0
    %v836 = vmax.f32 %v820, 0.0
    %v837 = vpack.c.bf16 %v822, %v821
    %v838 = vpack.c.bf16 %v824, %v823
    %v839 = vpack.c.bf16 %v826, %v825
    %v840 = vpack.c.bf16 %v828, %v827
    %v841 = vpack.c.bf16 %v830, %v829
    %v842 = vpack.c.bf16 %v832, %v831
    %v843 = vpack.c.bf16 %v834, %v833
    %v844 = vpack.c.bf16 %v836, %v835
    %v845 = vld [vmem:[#allocation7] sm:$0xf]
    %v846 = vld [vmem:[#allocation7 + $0x4] sm:$0xf]
    %v847 = vld [vmem:[#allocation7 + $0x8] sm:$0xf]
    %v848 = vld [vmem:[#allocation7 + $0xc] sm:$0xf]
    %v849 = vld [vmem:[#allocation7 + $0x10] sm:$0xf]
    %v850 = vld [vmem:[#allocation7 + $0x14] sm:$0xf]
    %v851 = vld [vmem:[#allocation7 + $0x18] sm:$0xf]
    %v852 = vld [vmem:[#allocation7 + $0x1c] sm:$0xf]
    %v853 = vld [vmem:[#allocation7 + $0x20] sm:$0xf]
    %v854 = vld [vmem:[#allocation7 + $0x24] sm:$0xf]
    %v855 = vld [vmem:[#allocation7 + $0x28] sm:$0xf]
    %v856 = vld [vmem:[#allocation7 + $0x2c] sm:$0xf]
    %v857 = vld [vmem:[#allocation7 + $0x30] sm:$0xf]
    %v858 = vld [vmem:[#allocation7 + $0x34] sm:$0xf]
    %v859 = vld [vmem:[#allocation7 + $0x38] sm:$0xf]
    %v860 = vld [vmem:[#allocation7 + $0x3c] sm:$0xf]
    %v861 = vld [vmem:[#allocation8] sm:$0xf]
    %v862 = vld [vmem:[#allocation8 + $0x4] sm:$0xf]
    %v863 = vld [vmem:[#allocation8 + $0x8] sm:$0xf]
    %v864 = vld [vmem:[#allocation8 + $0xc] sm:$0xf]
    %v865 = vld [vmem:[#allocation8 + $0x10] sm:$0xf]
    %v866 = vld [vmem:[#allocation8 + $0x14] sm:$0xf]
    %v867 = vld [vmem:[#allocation8 + $0x18] sm:$0xf]
    %v868 = vld [vmem:[#allocation8 + $0x1c] sm:$0xf]
    %v869 = vld [vmem:[#allocation8 + $0x20] sm:$0xf]
    %v870 = vld [vmem:[#allocation8 + $0x24] sm:$0xf]
    %v871 = vld [vmem:[#allocation8 + $0x28] sm:$0xf]
    %v872 = vld [vmem:[#allocation8 + $0x2c] sm:$0xf]
    %v873 = vld [vmem:[#allocation8 + $0x30] sm:$0xf]
    %v874 = vld [vmem:[#allocation8 + $0x34] sm:$0xf]
    %v875 = vld [vmem:[#allocation8 + $0x38] sm:$0xf]
    %v876 = vld [vmem:[#allocation8 + $0x3c] sm:$0xf]
    %v877 = vld [vmem:[%s10] sm:$0x1]
    %878 = vmatprep.subr.bf16.mxu0 0
    %879 = vmatpush1.bf16.msra.mxu0 %v837
    %880 = vmatprep.subr.bf16.mxu0 0
    %881 = vmatpush1.bf16.msra.mxu0 %v838
    %882 = vmatprep.subr.bf16.mxu0 0
    %883 = vmatpush1.bf16.msra.mxu0 %v839
    %884 = vmatprep.subr.bf16.mxu0 0
    %885 = vmatpush1.bf16.msra.mxu0 %v840
    %886 = vmatprep.subr.bf16.mxu0 0
    %887 = vmatpush1.bf16.msra.mxu0 %v841
    %888 = vmatprep.subr.bf16.mxu0 0
    %889 = vmatpush1.bf16.msra.mxu0 %v842
    %890 = vmatprep.subr.bf16.mxu0 0
    %891 = vmatpush1.bf16.msra.mxu0 %v843
    %892 = vmatprep.subr.bf16.mxu0 0
    %893 = vmatpush1.bf16.msra.mxu0 %v844
    %894 = vmatprep.subr.bf16.mxu0 0
    %895 = vmatpush1.bf16.msra.mxu0 0
    %896 = vmatprep.subr.bf16.mxu0 0
    %897 = vmatpush1.bf16.msra.mxu0 0
    %898 = vmatprep.subr.bf16.mxu0 0
    %899 = vmatpush1.bf16.msra.mxu0 0
    %900 = vmatprep.subr.bf16.mxu0 0
    %901 = vmatpush1.bf16.msra.mxu0 0
    %902 = vmatprep.subr.bf16.mxu0 0
    %903 = vmatpush1.bf16.msra.mxu0 0
    %904 = vmatprep.subr.bf16.mxu0 0
    %905 = vmatpush1.bf16.msra.mxu0 0
    %906 = vmatprep.subr.bf16.mxu0 0
    %907 = vmatpush1.bf16.msra.mxu0 0
    %908 = vmatprep.subr.bf16.mxu0 0
    %909 = vmatpush1.bf16.msra.mxu0 0
    %910 = vmatprep.mubr.bf16.mxu0 0
    %911 = vmatmul.mubr.bf16.gmra.mrb[0].mxu0 %v244
    %v912 = vpop.f32.mrb[0].mxu0
    %v913 = vadd.f32 0.0, %v912
    %v914 = vpop.f32.mrb[0].mxu0
    %v915 = vpop.f32.mrb[0].mxu0
    %v916 = vadd.f32 0.0, %v915
    %v917 = vpop.f32.mrb[0].mxu0
    %918 = vmatprep.mubr.bf16.mxu0 0
    %919 = vmatmul.mubr.bf16.gmra.mrb[0].mxu0 %v245
    %v920 = vpop.f32.mrb[0].mxu0
    %v921 = vadd.f32 0.0, %v920
    %v922 = vpop.f32.mrb[0].mxu0
    %v923 = vpop.f32.mrb[0].mxu0
    %v924 = vadd.f32 0.0, %v923
    %v925 = vpop.f32.mrb[0].mxu0
    %926 = vmatprep.mubr.bf16.mxu0 0
    %927 = vmatmul.mubr.bf16.gmra.mrb[0].mxu0 %v246
    %v928 = vpop.f32.mrb[0].mxu0
    %v929 = vadd.f32 0.0, %v928
    %v930 = vpop.f32.mrb[0].mxu0
    %v931 = vpop.f32.mrb[0].mxu0
    %v932 = vadd.f32 0.0, %v931
    %v933 = vpop.f32.mrb[0].mxu0
    %934 = vmatprep.mubr.bf16.mxu0 0
    %935 = vmatmul.mubr.bf16.gmra.mrb[0].mxu0 %v247
    %v936 = vpop.f32.mrb[0].mxu0
    %v937 = vadd.f32 0.0, %v936
    %v938 = vpop.f32.mrb[0].mxu0
    %v939 = vpop.f32.mrb[0].mxu0
    %v940 = vadd.f32 0.0, %v939
    %v941 = vpop.f32.mrb[0].mxu0
    %942 = vmatprep.mubr.bf16.mxu0 0
    %943 = vmatmul.mubr.bf16.gmra.mrb[0].mxu0 %v248
    %v944 = vpop.f32.mrb[0].mxu0
    %v945 = vadd.f32 0.0, %v944
    %v946 = vpop.f32.mrb[0].mxu0
    %v947 = vpop.f32.mrb[0].mxu0
    %v948 = vadd.f32 0.0, %v947
    %v949 = vpop.f32.mrb[0].mxu0
    %950 = vmatprep.mubr.bf16.mxu0 0
    %951 = vmatmul.mubr.bf16.gmra.mrb[0].mxu0 %v249
    %v952 = vpop.f32.mrb[0].mxu0
    %v953 = vadd.f32 0.0, %v952
    %v954 = vpop.f32.mrb[0].mxu0
    %v955 = vpop.f32.mrb[0].mxu0
    %v956 = vadd.f32 0.0, %v955
    %v957 = vpop.f32.mrb[0].mxu0
    %958 = vmatprep.mubr.bf16.mxu0 0
    %959 = vmatmul.mubr.bf16.gmra.mrb[0].mxu0 %v250
    %v960 = vpop.f32.mrb[0].mxu0
    %v961 = vadd.f32 0.0, %v960
    %v962 = vpop.f32.mrb[0].mxu0
    %v963 = vpop.f32.mrb[0].mxu0
    %v964 = vadd.f32 0.0, %v963
    %v965 = vpop.f32.mrb[0].mxu0
    %966 = vmatprep.mubr.bf16.mxu0 0
    %967 = vmatmul.mubr.bf16.gmra.mrb[0].mxu0 %v251
    %v968 = vpop.f32.mrb[0].mxu0
    %v969 = vadd.f32 0.0, %v968
    %v970 = vpop.f32.mrb[0].mxu0
    %v971 = vpop.f32.mrb[0].mxu0
    %v972 = vadd.f32 0.0, %v971
    %v973 = vpop.f32.mrb[0].mxu0
    %974 = vdwg.mxu0
    %v975 = vmul.f32 %v913, %v408
    %v976 = vmul.f32 %v916, %v413
    %v977 = vmul.f32 %v921, %v418
    %v978 = vmul.f32 %v924, %v423
    %v979 = vmul.f32 %v929, %v428
    %v980 = vmul.f32 %v932, %v433
    %v981 = vmul.f32 %v937, %v438
    %v982 = vmul.f32 %v940, %v443
    %v983 = vmul.f32 %v945, %v448
    %v984 = vmul.f32 %v948, %v453
    %v985 = vmul.f32 %v953, %v458
    %v986 = vmul.f32 %v956, %v463
    %v987 = vmul.f32 %v961, %v468
    %v988 = vmul.f32 %v964, %v473
    %v989 = vmul.f32 %v969, %v478
    %v990 = vmul.f32 %v972, %v483
    %v991 = vpack.c.bf16 %v976, %v975
    %v992 = vpack.c.bf16 %v978, %v977
    %v993 = vpack.c.bf16 %v980, %v979
    %v994 = vpack.c.bf16 %v982, %v981
    %v995 = vpack.c.bf16 %v984, %v983
    %v996 = vpack.c.bf16 %v986, %v985
    %v997 = vpack.c.bf16 %v988, %v987
    %v998 = vpack.c.bf16 %v990, %v989
    %v1015 = vunpack.c.l.b16 %v861
    %v1016 = vunpack.c.l.b16 %v862
    %v1017 = vunpack.c.l.b16 %v863
    %v1018 = vunpack.c.l.b16 %v864
    %v1019 = vunpack.c.l.b16 %v865
    %v1020 = vunpack.c.l.b16 %v866
    %v1021 = vunpack.c.l.b16 %v867
    %v1022 = vunpack.c.l.b16 %v868
    %v1023 = vunpack.c.l.b16 %v869
    %v1024 = vunpack.c.l.b16 %v870
    %v1025 = vunpack.c.l.b16 %v871
    %v1026 = vunpack.c.l.b16 %v872
    %v1027 = vunpack.c.l.b16 %v873
    %v1028 = vunpack.c.l.b16 %v874
    %v1029 = vunpack.c.l.b16 %v875
    %v1030 = vunpack.c.l.b16 %v876
    %v1031 = vpack.c.b16 %v1016, %v1015
    %v1032 = vpack.c.b16 %v1018, %v1017
    %v1033 = vpack.c.b16 %v1020, %v1019
    %v1034 = vpack.c.b16 %v1022, %v1021
    %v1035 = vpack.c.b16 %v1024, %v1023
    %v1036 = vpack.c.b16 %v1026, %v1025
    %v1037 = vpack.c.b16 %v1028, %v1027
    %v1038 = vpack.c.b16 %v1030, %v1029
    %1047 = vmatprep.subr.bf16.mxu0 0
    %1048 = vmatpush1.bf16.msra.mxu0 %v1031
    %1049 = vmatprep.subr.bf16.mxu0 0
    %1050 = vmatpush1.bf16.msra.mxu0 %v1032
    %1051 = vmatprep.subr.bf16.mxu0 0
    %1052 = vmatpush1.bf16.msra.mxu0 %v1033
    %1053 = vmatprep.subr.bf16.mxu0 0
    %1054 = vmatpush1.bf16.msra.mxu0 %v1034
    %1055 = vmatprep.subr.bf16.mxu0 0
    %1056 = vmatpush1.bf16.msra.mxu0 %v1035
    %1057 = vmatprep.subr.bf16.mxu0 0
    %1058 = vmatpush1.bf16.msra.mxu0 %v1036
    %1059 = vmatprep.subr.bf16.mxu0 0
    %1060 = vmatpush1.bf16.msra.mxu0 %v1037
    %1061 = vmatprep.subr.bf16.mxu0 0
    %1062 = vmatpush1.bf16.msra.mxu0 %v1038
    %1063 = vmatprep.subr.bf16.mxu0 0
    %1064 = vmatpush1.bf16.msra.mxu0 0
    %1065 = vmatprep.subr.bf16.mxu0 0
    %1066 = vmatpush1.bf16.msra.mxu0 0
    %1067 = vmatprep.subr.bf16.mxu0 0
    %1068 = vmatpush1.bf16.msra.mxu0 0
    %1069 = vmatprep.subr.bf16.mxu0 0
    %1070 = vmatpush1.bf16.msra.mxu0 0
    %1071 = vmatprep.subr.bf16.mxu0 0
    %1072 = vmatpush1.bf16.msra.mxu0 0
    %1073 = vmatprep.subr.bf16.mxu0 0
    %1074 = vmatpush1.bf16.msra.mxu0 0
    %1075 = vmatprep.subr.bf16.mxu0 0
    %1076 = vmatpush1.bf16.msra.mxu0 0
    %1077 = vmatprep.subr.bf16.mxu0 0
    %1078 = vmatpush1.bf16.msra.mxu0 0
    %1079 = vmatprep.mubr.bf16.mxu0 0
    %1080 = vmatmul.mubr.bf16.gmra.mrb[0].mxu0 %v837
    %v1081 = vpop.f32.mrb[0].mxu0
    %v1082 = vadd.f32 0.0, %v1081
    %v1083 = vpop.f32.mrb[0].mxu0
    %v1084 = vpop.f32.mrb[0].mxu0
    %v1085 = vadd.f32 0.0, %v1084
    %v1086 = vpop.f32.mrb[0].mxu0
    %1087 = vmatprep.mubr.bf16.mxu0 0
    %1088 = vmatmul.mubr.bf16.gmra.mrb[0].mxu0 %v838
    %v1089 = vpop.f32.mrb[0].mxu0
    %v1090 = vadd.f32 0.0, %v1089
    %v1091 = vpop.f32.mrb[0].mxu0
    %v1092 = vpop.f32.mrb[0].mxu0
    %v1093 = vadd.f32 0.0, %v1092
    %v1094 = vpop.f32.mrb[0].mxu0
    %1095 = vmatprep.mubr.bf16.mxu0 0
    %1096 = vmatmul.mubr.bf16.gmra.mrb[0].mxu0 %v839
    %v1097 = vpop.f32.mrb[0].mxu0
    %v1098 = vadd.f32 0.0, %v1097
    %v1099 = vpop.f32.mrb[0].mxu0
    %v1100 = vpop.f32.mrb[0].mxu0
    %v1101 = vadd.f32 0.0, %v1100
    %v1102 = vpop.f32.mrb[0].mxu0
    %1103 = vmatprep.mubr.bf16.mxu0 0
    %1104 = vmatmul.mubr.bf16.gmra.mrb[0].mxu0 %v840
    %v1105 = vpop.f32.mrb[0].mxu0
    %v1106 = vadd.f32 0.0, %v1105
    %v1107 = vpop.f32.mrb[0].mxu0
    %v1108 = vpop.f32.mrb[0].mxu0
    %v1109 = vadd.f32 0.0, %v1108
    %v1110 = vpop.f32.mrb[0].mxu0
    %1111 = vmatprep.mubr.bf16.mxu0 0
    %1112 = vmatmul.mubr.bf16.gmra.mrb[0].mxu0 %v841
    %v1113 = vpop.f32.mrb[0].mxu0
    %v1114 = vadd.f32 0.0, %v1113
    %v1115 = vpop.f32.mrb[0].mxu0
    %v1116 = vpop.f32.mrb[0].mxu0
    %v1117 = vadd.f32 0.0, %v1116
    %v1118 = vpop.f32.mrb[0].mxu0
    %1119 = vmatprep.mubr.bf16.mxu0 0
    %1120 = vmatmul.mubr.bf16.gmra.mrb[0].mxu0 %v842
    %v1121 = vpop.f32.mrb[0].mxu0
    %v1122 = vadd.f32 0.0, %v1121
    %v1123 = vpop.f32.mrb[0].mxu0
    %v1124 = vpop.f32.mrb[0].mxu0
    %v1125 = vadd.f32 0.0, %v1124
    %v1126 = vpop.f32.mrb[0].mxu0
    %1127 = vmatprep.mubr.bf16.mxu0 0
    %1128 = vmatmul.mubr.bf16.gmra.mrb[0].mxu0 %v843
    %v1129 = vpop.f32.mrb[0].mxu0
    %v1130 = vadd.f32 0.0, %v1129
    %v1131 = vpop.f32.mrb[0].mxu0
    %v1132 = vpop.f32.mrb[0].mxu0
    %v1133 = vadd.f32 0.0, %v1132
    %v1134 = vpop.f32.mrb[0].mxu0
    %1135 = vmatprep.mubr.bf16.mxu0 0
    %1136 = vmatmul.mubr.bf16.gmra.mrb[0].mxu0 %v844
    %v1137 = vpop.f32.mrb[0].mxu0
    %v1138 = vadd.f32 0.0, %v1137
    %v1139 = vpop.f32.mrb[0].mxu0
    %v1140 = vpop.f32.mrb[0].mxu0
    %v1141 = vadd.f32 0.0, %v1140
    %v1142 = vpop.f32.mrb[0].mxu0
    %1143 = vdwg.mxu0
    %v1160 = vunpack.c.l.b16 %v845
    %v1161 = vunpack.c.l.b16 %v846
    %v1162 = vunpack.c.l.b16 %v847
    %v1163 = vunpack.c.l.b16 %v848
    %v1164 = vunpack.c.l.b16 %v849
    %v1165 = vunpack.c.l.b16 %v850
    %v1166 = vunpack.c.l.b16 %v851
    %v1167 = vunpack.c.l.b16 %v852
    %v1168 = vunpack.c.l.b16 %v853
    %v1169 = vunpack.c.l.b16 %v854
    %v1170 = vunpack.c.l.b16 %v855
    %v1171 = vunpack.c.l.b16 %v856
    %v1172 = vunpack.c.l.b16 %v857
    %v1173 = vunpack.c.l.b16 %v858
    %v1174 = vunpack.c.l.b16 %v859
    %v1175 = vunpack.c.l.b16 %v860
    %v1176 = vpack.c.b16 %v1161, %v1160
    %v1177 = vpack.c.b16 %v1163, %v1162
    %v1178 = vpack.c.b16 %v1165, %v1164
    %v1179 = vpack.c.b16 %v1167, %v1166
    %v1180 = vpack.c.b16 %v1169, %v1168
    %v1181 = vpack.c.b16 %v1171, %v1170
    %v1182 = vpack.c.b16 %v1173, %v1172
    %v1183 = vpack.c.b16 %v1175, %v1174
    %1192 = vmatprep.subr.bf16.mxu0 0
    %1193 = vmatpush1.bf16.msra.mxu0 %v1176
    %1194 = vmatprep.subr.bf16.mxu0 0
    %1195 = vmatpush1.bf16.msra.mxu0 %v1177
    %1196 = vmatprep.subr.bf16.mxu0 0
    %1197 = vmatpush1.bf16.msra.mxu0 %v1178
    %1198 = vmatprep.subr.bf16.mxu0 0
    %1199 = vmatpush1.bf16.msra.mxu0 %v1179
    %1200 = vmatprep.subr.bf16.mxu0 0
    %1201 = vmatpush1.bf16.msra.mxu0 %v1180
    %1202 = vmatprep.subr.bf16.mxu0 0
    %1203 = vmatpush1.bf16.msra.mxu0 %v1181
    %1204 = vmatprep.subr.bf16.mxu0 0
    %1205 = vmatpush1.bf16.msra.mxu0 %v1182
    %1206 = vmatprep.subr.bf16.mxu0 0
    %1207 = vmatpush1.bf16.msra.mxu0 %v1183
    %1208 = vmatprep.subr.bf16.mxu0 0
    %1209 = vmatpush1.bf16.msra.mxu0 0
    %1210 = vmatprep.subr.bf16.mxu0 0
    %1211 = vmatpush1.bf16.msra.mxu0 0
    %1212 = vmatprep.subr.bf16.mxu0 0
    %1213 = vmatpush1.bf16.msra.mxu0 0
    %1214 = vmatprep.subr.bf16.mxu0 0
    %1215 = vmatpush1.bf16.msra.mxu0 0
    %1216 = vmatprep.subr.bf16.mxu0 0
    %1217 = vmatpush1.bf16.msra.mxu0 0
    %1218 = vmatprep.subr.bf16.mxu0 0
    %1219 = vmatpush1.bf16.msra.mxu0 0
    %1220 = vmatprep.subr.bf16.mxu0 0
    %1221 = vmatpush1.bf16.msra.mxu0 0
    %1222 = vmatprep.subr.bf16.mxu0 0
    %1223 = vmatpush1.bf16.msra.mxu0 0
    %1224 = vmatprep.mubr.bf16.mxu0 0
    %1225 = vmatmul.mubr.bf16.gmra.mrb[0].mxu0 %v991
    %v1226 = vpop.f32.mrb[0].mxu0
    %v1227 = vadd.f32 %v1082, %v1226
    %v1228 = vpop.f32.mrb[0].mxu0
    %v1229 = vpop.f32.mrb[0].mxu0
    %v1230 = vadd.f32 %v1085, %v1229
    %v1231 = vpop.f32.mrb[0].mxu0
    %1232 = vmatprep.mubr.bf16.mxu0 0
    %1233 = vmatmul.mubr.bf16.gmra.mrb[0].mxu0 %v992
    %v1234 = vpop.f32.mrb[0].mxu0
    %v1235 = vadd.f32 %v1090, %v1234
    %v1236 = vpop.f32.mrb[0].mxu0
    %v1237 = vpop.f32.mrb[0].mxu0
    %v1238 = vadd.f32 %v1093, %v1237
    %v1239 = vpop.f32.mrb[0].mxu0
    %1240 = vmatprep.mubr.bf16.mxu0 0
    %1241 = vmatmul.mubr.bf16.gmra.mrb[0].mxu0 %v993
    %v1242 = vpop.f32.mrb[0].mxu0
    %v1243 = vadd.f32 %v1098, %v1242
    %v1244 = vpop.f32.mrb[0].mxu0
    %v1245 = vpop.f32.mrb[0].mxu0
    %v1246 = vadd.f32 %v1101, %v1245
    %v1247 = vpop.f32.mrb[0].mxu0
    %1248 = vmatprep.mubr.bf16.mxu0 0
    %1249 = vmatmul.mubr.bf16.gmra.mrb[0].mxu0 %v994
    %v1250 = vpop.f32.mrb[0].mxu0
    %v1251 = vadd.f32 %v1106, %v1250
    %v1252 = vpop.f32.mrb[0].mxu0
    %v1253 = vpop.f32.mrb[0].mxu0
    %v1254 = vadd.f32 %v1109, %v1253
    %v1255 = vpop.f32.mrb[0].mxu0
    %1256 = vmatprep.mubr.bf16.mxu0 0
    %1257 = vmatmul.mubr.bf16.gmra.mrb[0].mxu0 %v995
    %v1258 = vpop.f32.mrb[0].mxu0
    %v1259 = vadd.f32 %v1114, %v1258
    %v1260 = vpop.f32.mrb[0].mxu0
    %v1261 = vpop.f32.mrb[0].mxu0
    %v1262 = vadd.f32 %v1117, %v1261
    %v1263 = vpop.f32.mrb[0].mxu0
    %1264 = vmatprep.mubr.bf16.mxu0 0
    %1265 = vmatmul.mubr.bf16.gmra.mrb[0].mxu0 %v996
    %v1266 = vpop.f32.mrb[0].mxu0
    %v1267 = vadd.f32 %v1122, %v1266
    %v1268 = vpop.f32.mrb[0].mxu0
    %v1269 = vpop.f32.mrb[0].mxu0
    %v1270 = vadd.f32 %v1125, %v1269
    %v1271 = vpop.f32.mrb[0].mxu0
    %1272 = vmatprep.mubr.bf16.mxu0 0
    %1273 = vmatmul.mubr.bf16.gmra.mrb[0].mxu0 %v997
    %v1274 = vpop.f32.mrb[0].mxu0
    %v1275 = vadd.f32 %v1130, %v1274
    %v1276 = vpop.f32.mrb[0].mxu0
    %v1277 = vpop.f32.mrb[0].mxu0
    %v1278 = vadd.f32 %v1133, %v1277
    %v1279 = vpop.f32.mrb[0].mxu0
    %1280 = vmatprep.mubr.bf16.mxu0 0
    %1281 = vmatmul.mubr.bf16.gmra.mrb[0].mxu0 %v998
    %v1282 = vpop.f32.mrb[0].mxu0
    %v1283 = vadd.f32 %v1138, %v1282
    %v1284 = vpop.f32.mrb[0].mxu0
    %v1285 = vpop.f32.mrb[0].mxu0
    %v1286 = vadd.f32 %v1141, %v1285
    %v1287 = vpop.f32.mrb[0].mxu0
    %1288 = vdwg.mxu0
    %v1290 = vlaneseq
    %v1291 = vshrl.u32 %v1290, 7
    %v1292 = vsub.s32 0, %v1291
    %v1293 = vrot.slane %v877, %v1292
    %v1295 = vadd.f32 %v1227, %v1293
    %v1296 = vadd.f32 %v1230, %v1293
    %v1297 = vadd.f32 %v1235, %v1293
    %v1298 = vadd.f32 %v1238, %v1293
    %v1299 = vadd.f32 %v1243, %v1293
    %v1300 = vadd.f32 %v1246, %v1293
    %v1301 = vadd.f32 %v1251, %v1293
    %v1302 = vadd.f32 %v1254, %v1293
    %v1303 = vadd.f32 %v1259, %v1293
    %v1304 = vadd.f32 %v1262, %v1293
    %v1305 = vadd.f32 %v1267, %v1293
    %v1306 = vadd.f32 %v1270, %v1293
    %v1307 = vadd.f32 %v1275, %v1293
    %v1308 = vadd.f32 %v1278, %v1293
    %v1309 = vadd.f32 %v1283, %v1293
    %v1310 = vadd.f32 %v1286, %v1293
    %v1311 = vmax.f32 %v1295, 0.0
    %v1312 = vmax.f32 %v1296, 0.0
    %v1313 = vmax.f32 %v1297, 0.0
    %v1314 = vmax.f32 %v1298, 0.0
    %v1315 = vmax.f32 %v1299, 0.0
    %v1316 = vmax.f32 %v1300, 0.0
    %v1317 = vmax.f32 %v1301, 0.0
    %v1318 = vmax.f32 %v1302, 0.0
    %v1319 = vmax.f32 %v1303, 0.0
    %v1320 = vmax.f32 %v1304, 0.0
    %v1321 = vmax.f32 %v1305, 0.0
    %v1322 = vmax.f32 %v1306, 0.0
    %v1323 = vmax.f32 %v1307, 0.0
    %v1324 = vmax.f32 %v1308, 0.0
    %v1325 = vmax.f32 %v1309, 0.0
    %v1326 = vmax.f32 %v1310, 0.0
    %v1327 = vpack.c.bf16 %v1312, %v1311
    %v1328 = vpack.c.bf16 %v1314, %v1313
    %v1329 = vpack.c.bf16 %v1316, %v1315
    %v1330 = vpack.c.bf16 %v1318, %v1317
    %v1331 = vpack.c.bf16 %v1320, %v1319
    %v1332 = vpack.c.bf16 %v1322, %v1321
    %v1333 = vpack.c.bf16 %v1324, %v1323
    %v1334 = vpack.c.bf16 %v1326, %v1325
    %v1335 = vld [vmem:[#allocation10] sm:$0xf]
    %v1336 = vld [vmem:[#allocation10 + $0x4] sm:$0xf]
    %v1337 = vld [vmem:[#allocation10 + $0x8] sm:$0xf]
    %v1338 = vld [vmem:[#allocation10 + $0xc] sm:$0xf]
    %v1339 = vld [vmem:[#allocation10 + $0x10] sm:$0xf]
    %v1340 = vld [vmem:[#allocation10 + $0x14] sm:$0xf]
    %v1341 = vld [vmem:[#allocation10 + $0x18] sm:$0xf]
    %v1342 = vld [vmem:[#allocation10 + $0x1c] sm:$0xf]
    %v1343 = vld [vmem:[#allocation10 + $0x20] sm:$0xf]
    %v1344 = vld [vmem:[#allocation10 + $0x24] sm:$0xf]
    %v1345 = vld [vmem:[#allocation10 + $0x28] sm:$0xf]
    %v1346 = vld [vmem:[#allocation10 + $0x2c] sm:$0xf]
    %v1347 = vld [vmem:[#allocation10 + $0x30] sm:$0xf]
    %v1348 = vld [vmem:[#allocation10 + $0x34] sm:$0xf]
    %v1349 = vld [vmem:[#allocation10 + $0x38] sm:$0xf]
    %v1350 = vld [vmem:[#allocation10 + $0x3c] sm:$0xf]
    %v1351 = vld [vmem:[#allocation11] sm:$0xf]
    %v1352 = vld [vmem:[#allocation11 + $0x4] sm:$0xf]
    %v1353 = vld [vmem:[#allocation11 + $0x8] sm:$0xf]
    %v1354 = vld [vmem:[#allocation11 + $0xc] sm:$0xf]
    %v1355 = vld [vmem:[#allocation11 + $0x10] sm:$0xf]
    %v1356 = vld [vmem:[#allocation11 + $0x14] sm:$0xf]
    %v1357 = vld [vmem:[#allocation11 + $0x18] sm:$0xf]
    %v1358 = vld [vmem:[#allocation11 + $0x1c] sm:$0xf]
    %v1359 = vld [vmem:[#allocation11 + $0x20] sm:$0xf]
    %v1360 = vld [vmem:[#allocation11 + $0x24] sm:$0xf]
    %v1361 = vld [vmem:[#allocation11 + $0x28] sm:$0xf]
    %v1362 = vld [vmem:[#allocation11 + $0x2c] sm:$0xf]
    %v1363 = vld [vmem:[#allocation11 + $0x30] sm:$0xf]
    %v1364 = vld [vmem:[#allocation11 + $0x34] sm:$0xf]
    %v1365 = vld [vmem:[#allocation11 + $0x38] sm:$0xf]
    %v1366 = vld [vmem:[#allocation11 + $0x3c] sm:$0xf]
    %v1367 = vld [vmem:[%s13] sm:$0x1]
    %1368 = vmatprep.subr.bf16.mxu0 0
    %1369 = vmatpush1.bf16.msra.mxu0 %v1327
    %1370 = vmatprep.subr.bf16.mxu0 0
    %1371 = vmatpush1.bf16.msra.mxu0 %v1328
    %1372 = vmatprep.subr.bf16.mxu0 0
    %1373 = vmatpush1.bf16.msra.mxu0 %v1329
    %1374 = vmatprep.subr.bf16.mxu0 0
    %1375 = vmatpush1.bf16.msra.mxu0 %v1330
    %1376 = vmatprep.subr.bf16.mxu0 0
    %1377 = vmatpush1.bf16.msra.mxu0 %v1331
    %1378 = vmatprep.subr.bf16.mxu0 0
    %1379 = vmatpush1.bf16.msra.mxu0 %v1332
    %1380 = vmatprep.subr.bf16.mxu0 0
    %1381 = vmatpush1.bf16.msra.mxu0 %v1333
    %1382 = vmatprep.subr.bf16.mxu0 0
    %1383 = vmatpush1.bf16.msra.mxu0 %v1334
    %1384 = vmatprep.subr.bf16.mxu0 0
    %1385 = vmatpush1.bf16.msra.mxu0 0
    %1386 = vmatprep.subr.bf16.mxu0 0
    %1387 = vmatpush1.bf16.msra.mxu0 0
    %1388 = vmatprep.subr.bf16.mxu0 0
    %1389 = vmatpush1.bf16.msra.mxu0 0
    %1390 = vmatprep.subr.bf16.mxu0 0
    %1391 = vmatpush1.bf16.msra.mxu0 0
    %1392 = vmatprep.subr.bf16.mxu0 0
    %1393 = vmatpush1.bf16.msra.mxu0 0
    %1394 = vmatprep.subr.bf16.mxu0 0
    %1395 = vmatpush1.bf16.msra.mxu0 0
    %1396 = vmatprep.subr.bf16.mxu0 0
    %1397 = vmatpush1.bf16.msra.mxu0 0
    %1398 = vmatprep.subr.bf16.mxu0 0
    %1399 = vmatpush1.bf16.msra.mxu0 0
    %1400 = vmatprep.mubr.bf16.mxu0 0
    %1401 = vmatmul.mubr.bf16.gmra.mrb[0].mxu0 %v244
    %v1402 = vpop.f32.mrb[0].mxu0
    %v1403 = vadd.f32 0.0, %v1402
    %v1404 = vpop.f32.mrb[0].mxu0
    %v1405 = vpop.f32.mrb[0].mxu0
    %v1406 = vadd.f32 0.0, %v1405
    %v1407 = vpop.f32.mrb[0].mxu0
    %1408 = vmatprep.mubr.bf16.mxu0 0
    %1409 = vmatmul.mubr.bf16.gmra.mrb[0].mxu0 %v245
    %v1410 = vpop.f32.mrb[0].mxu0
    %v1411 = vadd.f32 0.0, %v1410
    %v1412 = vpop.f32.mrb[0].mxu0
    %v1413 = vpop.f32.mrb[0].mxu0
    %v1414 = vadd.f32 0.0, %v1413
    %v1415 = vpop.f32.mrb[0].mxu0
    %1416 = vmatprep.mubr.bf16.mxu0 0
    %1417 = vmatmul.mubr.bf16.gmra.mrb[0].mxu0 %v246
    %v1418 = vpop.f32.mrb[0].mxu0
    %v1419 = vadd.f32 0.0, %v1418
    %v1420 = vpop.f32.mrb[0].mxu0
    %v1421 = vpop.f32.mrb[0].mxu0
    %v1422 = vadd.f32 0.0, %v1421
    %v1423 = vpop.f32.mrb[0].mxu0
    %1424 = vmatprep.mubr.bf16.mxu0 0
    %1425 = vmatmul.mubr.bf16.gmra.mrb[0].mxu0 %v247
    %v1426 = vpop.f32.mrb[0].mxu0
    %v1427 = vadd.f32 0.0, %v1426
    %v1428 = vpop.f32.mrb[0].mxu0
    %v1429 = vpop.f32.mrb[0].mxu0
    %v1430 = vadd.f32 0.0, %v1429
    %v1431 = vpop.f32.mrb[0].mxu0
    %1432 = vmatprep.mubr.bf16.mxu0 0
    %1433 = vmatmul.mubr.bf16.gmra.mrb[0].mxu0 %v248
    %v1434 = vpop.f32.mrb[0].mxu0
    %v1435 = vadd.f32 0.0, %v1434
    %v1436 = vpop.f32.mrb[0].mxu0
    %v1437 = vpop.f32.mrb[0].mxu0
    %v1438 = vadd.f32 0.0, %v1437
    %v1439 = vpop.f32.mrb[0].mxu0
    %1440 = vmatprep.mubr.bf16.mxu0 0
    %1441 = vmatmul.mubr.bf16.gmra.mrb[0].mxu0 %v249
    %v1442 = vpop.f32.mrb[0].mxu0
    %v1443 = vadd.f32 0.0, %v1442
    %v1444 = vpop.f32.mrb[0].mxu0
    %v1445 = vpop.f32.mrb[0].mxu0
    %v1446 = vadd.f32 0.0, %v1445
    %v1447 = vpop.f32.mrb[0].mxu0
    %1448 = vmatprep.mubr.bf16.mxu0 0
    %1449 = vmatmul.mubr.bf16.gmra.mrb[0].mxu0 %v250
    %v1450 = vpop.f32.mrb[0].mxu0
    %v1451 = vadd.f32 0.0, %v1450
    %v1452 = vpop.f32.mrb[0].mxu0
    %v1453 = vpop.f32.mrb[0].mxu0
    %v1454 = vadd.f32 0.0, %v1453
    %v1455 = vpop.f32.mrb[0].mxu0
    %1456 = vmatprep.mubr.bf16.mxu0 0
    %1457 = vmatmul.mubr.bf16.gmra.mrb[0].mxu0 %v251
    %v1458 = vpop.f32.mrb[0].mxu0
    %v1459 = vadd.f32 0.0, %v1458
    %v1460 = vpop.f32.mrb[0].mxu0
    %v1461 = vpop.f32.mrb[0].mxu0
    %v1462 = vadd.f32 0.0, %v1461
    %v1463 = vpop.f32.mrb[0].mxu0
    %1464 = vdwg.mxu0
    %v1465 = vmul.f32 %v1403, %v408
    %v1466 = vmul.f32 %v1406, %v413
    %v1467 = vmul.f32 %v1411, %v418
    %v1468 = vmul.f32 %v1414, %v423
    %v1469 = vmul.f32 %v1419, %v428
    %v1470 = vmul.f32 %v1422, %v433
    %v1471 = vmul.f32 %v1427, %v438
    %v1472 = vmul.f32 %v1430, %v443
    %v1473 = vmul.f32 %v1435, %v448
    %v1474 = vmul.f32 %v1438, %v453
    %v1475 = vmul.f32 %v1443, %v458
    %v1476 = vmul.f32 %v1446, %v463
    %v1477 = vmul.f32 %v1451, %v468
    %v1478 = vmul.f32 %v1454, %v473
    %v1479 = vmul.f32 %v1459, %v478
    %v1480 = vmul.f32 %v1462, %v483
    %v1481 = vpack.c.bf16 %v1466, %v1465
    %v1482 = vpack.c.bf16 %v1468, %v1467
    %v1483 = vpack.c.bf16 %v1470, %v1469
    %v1484 = vpack.c.bf16 %v1472, %v1471
    %v1485 = vpack.c.bf16 %v1474, %v1473
    %v1486 = vpack.c.bf16 %v1476, %v1475
    %v1487 = vpack.c.bf16 %v1478, %v1477
    %v1488 = vpack.c.bf16 %v1480, %v1479
    %v1505 = vunpack.c.l.b16 %v1351
    %v1506 = vunpack.c.l.b16 %v1352
    %v1507 = vunpack.c.l.b16 %v1353
    %v1508 = vunpack.c.l.b16 %v1354
    %v1509 = vunpack.c.l.b16 %v1355
    %v1510 = vunpack.c.l.b16 %v1356
    %v1511 = vunpack.c.l.b16 %v1357
    %v1512 = vunpack.c.l.b16 %v1358
    %v1513 = vunpack.c.l.b16 %v1359
    %v1514 = vunpack.c.l.b16 %v1360
    %v1515 = vunpack.c.l.b16 %v1361
    %v1516 = vunpack.c.l.b16 %v1362
    %v1517 = vunpack.c.l.b16 %v1363
    %v1518 = vunpack.c.l.b16 %v1364
    %v1519 = vunpack.c.l.b16 %v1365
    %v1520 = vunpack.c.l.b16 %v1366
    %v1521 = vpack.c.b16 %v1506, %v1505
    %v1522 = vpack.c.b16 %v1508, %v1507
    %v1523 = vpack.c.b16 %v1510, %v1509
    %v1524 = vpack.c.b16 %v1512, %v1511
    %v1525 = vpack.c.b16 %v1514, %v1513
    %v1526 = vpack.c.b16 %v1516, %v1515
    %v1527 = vpack.c.b16 %v1518, %v1517
    %v1528 = vpack.c.b16 %v1520, %v1519
    %1537 = vmatprep.subr.bf16.mxu0 0
    %1538 = vmatpush1.bf16.msra.mxu0 %v1521
    %1539 = vmatprep.subr.bf16.mxu0 0
    %1540 = vmatpush1.bf16.msra.mxu0 %v1522
    %1541 = vmatprep.subr.bf16.mxu0 0
    %1542 = vmatpush1.bf16.msra.mxu0 %v1523
    %1543 = vmatprep.subr.bf16.mxu0 0
    %1544 = vmatpush1.bf16.msra.mxu0 %v1524
    %1545 = vmatprep.subr.bf16.mxu0 0
    %1546 = vmatpush1.bf16.msra.mxu0 %v1525
    %1547 = vmatprep.subr.bf16.mxu0 0
    %1548 = vmatpush1.bf16.msra.mxu0 %v1526
    %1549 = vmatprep.subr.bf16.mxu0 0
    %1550 = vmatpush1.bf16.msra.mxu0 %v1527
    %1551 = vmatprep.subr.bf16.mxu0 0
    %1552 = vmatpush1.bf16.msra.mxu0 %v1528
    %1553 = vmatprep.subr.bf16.mxu0 0
    %1554 = vmatpush1.bf16.msra.mxu0 0
    %1555 = vmatprep.subr.bf16.mxu0 0
    %1556 = vmatpush1.bf16.msra.mxu0 0
    %1557 = vmatprep.subr.bf16.mxu0 0
    %1558 = vmatpush1.bf16.msra.mxu0 0
    %1559 = vmatprep.subr.bf16.mxu0 0
    %1560 = vmatpush1.bf16.msra.mxu0 0
    %1561 = vmatprep.subr.bf16.mxu0 0
    %1562 = vmatpush1.bf16.msra.mxu0 0
    %1563 = vmatprep.subr.bf16.mxu0 0
    %1564 = vmatpush1.bf16.msra.mxu0 0
    %1565 = vmatprep.subr.bf16.mxu0 0
    %1566 = vmatpush1.bf16.msra.mxu0 0
    %1567 = vmatprep.subr.bf16.mxu0 0
    %1568 = vmatpush1.bf16.msra.mxu0 0
    %1569 = vmatprep.mubr.bf16.mxu0 0
    %1570 = vmatmul.mubr.bf16.gmra.mrb[0].mxu0 %v1327
    %v1571 = vpop.f32.mrb[0].mxu0
    %v1572 = vadd.f32 0.0, %v1571
    %v1573 = vpop.f32.mrb[0].mxu0
    %v1574 = vpop.f32.mrb[0].mxu0
    %v1575 = vadd.f32 0.0, %v1574
    %v1576 = vpop.f32.mrb[0].mxu0
    %1577 = vmatprep.mubr.bf16.mxu0 0
    %1578 = vmatmul.mubr.bf16.gmra.mrb[0].mxu0 %v1328
    %v1579 = vpop.f32.mrb[0].mxu0
    %v1580 = vadd.f32 0.0, %v1579
    %v1581 = vpop.f32.mrb[0].mxu0
    %v1582 = vpop.f32.mrb[0].mxu0
    %v1583 = vadd.f32 0.0, %v1582
    %v1584 = vpop.f32.mrb[0].mxu0
    %1585 = vmatprep.mubr.bf16.mxu0 0
    %1586 = vmatmul.mubr.bf16.gmra.mrb[0].mxu0 %v1329
    %v1587 = vpop.f32.mrb[0].mxu0
    %v1588 = vadd.f32 0.0, %v1587
    %v1589 = vpop.f32.mrb[0].mxu0
    %v1590 = vpop.f32.mrb[0].mxu0
    %v1591 = vadd.f32 0.0, %v1590
    %v1592 = vpop.f32.mrb[0].mxu0
    %1593 = vmatprep.mubr.bf16.mxu0 0
    %1594 = vmatmul.mubr.bf16.gmra.mrb[0].mxu0 %v1330
    %v1595 = vpop.f32.mrb[0].mxu0
    %v1596 = vadd.f32 0.0, %v1595
    %v1597 = vpop.f32.mrb[0].mxu0
    %v1598 = vpop.f32.mrb[0].mxu0
    %v1599 = vadd.f32 0.0, %v1598
    %v1600 = vpop.f32.mrb[0].mxu0
    %1601 = vmatprep.mubr.bf16.mxu0 0
    %1602 = vmatmul.mubr.bf16.gmra.mrb[0].mxu0 %v1331
    %v1603 = vpop.f32.mrb[0].mxu0
    %v1604 = vadd.f32 0.0, %v1603
    %v1605 = vpop.f32.mrb[0].mxu0
    %v1606 = vpop.f32.mrb[0].mxu0
    %v1607 = vadd.f32 0.0, %v1606
    %v1608 = vpop.f32.mrb[0].mxu0
    %1609 = vmatprep.mubr.bf16.mxu0 0
    %1610 = vmatmul.mubr.bf16.gmra.mrb[0].mxu0 %v1332
    %v1611 = vpop.f32.mrb[0].mxu0
    %v1612 = vadd.f32 0.0, %v1611
    %v1613 = vpop.f32.mrb[0].mxu0
    %v1614 = vpop.f32.mrb[0].mxu0
    %v1615 = vadd.f32 0.0, %v1614
    %v1616 = vpop.f32.mrb[0].mxu0
    %1617 = vmatprep.mubr.bf16.mxu0 0
    %1618 = vmatmul.mubr.bf16.gmra.mrb[0].mxu0 %v1333
    %v1619 = vpop.f32.mrb[0].mxu0
    %v1620 = vadd.f32 0.0, %v1619
    %v1621 = vpop.f32.mrb[0].mxu0
    %v1622 = vpop.f32.mrb[0].mxu0
    %v1623 = vadd.f32 0.0, %v1622
    %v1624 = vpop.f32.mrb[0].mxu0
    %1625 = vmatprep.mubr.bf16.mxu0 0
    %1626 = vmatmul.mubr.bf16.gmra.mrb[0].mxu0 %v1334
    %v1627 = vpop.f32.mrb[0].mxu0
    %v1628 = vadd.f32 0.0, %v1627
    %v1629 = vpop.f32.mrb[0].mxu0
    %v1630 = vpop.f32.mrb[0].mxu0
    %v1631 = vadd.f32 0.0, %v1630
    %v1632 = vpop.f32.mrb[0].mxu0
    %1633 = vdwg.mxu0
    %v1650 = vunpack.c.l.b16 %v1335
    %v1651 = vunpack.c.l.b16 %v1336
    %v1652 = vunpack.c.l.b16 %v1337
    %v1653 = vunpack.c.l.b16 %v1338
    %v1654 = vunpack.c.l.b16 %v1339
    %v1655 = vunpack.c.l.b16 %v1340
    %v1656 = vunpack.c.l.b16 %v1341
    %v1657 = vunpack.c.l.b16 %v1342
    %v1658 = vunpack.c.l.b16 %v1343
    %v1659 = vunpack.c.l.b16 %v1344
    %v1660 = vunpack.c.l.b16 %v1345
    %v1661 = vunpack.c.l.b16 %v1346
    %v1662 = vunpack.c.l.b16 %v1347
    %v1663 = vunpack.c.l.b16 %v1348
    %v1664 = vunpack.c.l.b16 %v1349
    %v1665 = vunpack.c.l.b16 %v1350
    %v1666 = vpack.c.b16 %v1651, %v1650
    %v1667 = vpack.c.b16 %v1653, %v1652
    %v1668 = vpack.c.b16 %v1655, %v1654
    %v1669 = vpack.c.b16 %v1657, %v1656
    %v1670 = vpack.c.b16 %v1659, %v1658
    %v1671 = vpack.c.b16 %v1661, %v1660
    %v1672 = vpack.c.b16 %v1663, %v1662
    %v1673 = vpack.c.b16 %v1665, %v1664
    %1682 = vmatprep.subr.bf16.mxu0 0
    %1683 = vmatpush1.bf16.msra.mxu0 %v1666
    %1684 = vmatprep.subr.bf16.mxu0 0
    %1685 = vmatpush1.bf16.msra.mxu0 %v1667
    %1686 = vmatprep.subr.bf16.mxu0 0
    %1687 = vmatpush1.bf16.msra.mxu0 %v1668
    %1688 = vmatprep.subr.bf16.mxu0 0
    %1689 = vmatpush1.bf16.msra.mxu0 %v1669
    %1690 = vmatprep.subr.bf16.mxu0 0
    %1691 = vmatpush1.bf16.msra.mxu0 %v1670
    %1692 = vmatprep.subr.bf16.mxu0 0
    %1693 = vmatpush1.bf16.msra.mxu0 %v1671
    %1694 = vmatprep.subr.bf16.mxu0 0
    %1695 = vmatpush1.bf16.msra.mxu0 %v1672
    %1696 = vmatprep.subr.bf16.mxu0 0
    %1697 = vmatpush1.bf16.msra.mxu0 %v1673
    %1698 = vmatprep.subr.bf16.mxu0 0
    %1699 = vmatpush1.bf16.msra.mxu0 0
    %1700 = vmatprep.subr.bf16.mxu0 0
    %1701 = vmatpush1.bf16.msra.mxu0 0
    %1702 = vmatprep.subr.bf16.mxu0 0
    %1703 = vmatpush1.bf16.msra.mxu0 0
    %1704 = vmatprep.subr.bf16.mxu0 0
    %1705 = vmatpush1.bf16.msra.mxu0 0
    %1706 = vmatprep.subr.bf16.mxu0 0
    %1707 = vmatpush1.bf16.msra.mxu0 0
    %1708 = vmatprep.subr.bf16.mxu0 0
    %1709 = vmatpush1.bf16.msra.mxu0 0
    %1710 = vmatprep.subr.bf16.mxu0 0
    %1711 = vmatpush1.bf16.msra.mxu0 0
    %1712 = vmatprep.subr.bf16.mxu0 0
    %1713 = vmatpush1.bf16.msra.mxu0 0
    %1714 = vmatprep.mubr.bf16.mxu0 0
    %1715 = vmatmul.mubr.bf16.gmra.mrb[0].mxu0 %v1481
    %v1716 = vpop.f32.mrb[0].mxu0
    %v1717 = vadd.f32 %v1572, %v1716
    %v1718 = vpop.f32.mrb[0].mxu0
    %v1719 = vpop.f32.mrb[0].mxu0
    %v1720 = vadd.f32 %v1575, %v1719
    %v1721 = vpop.f32.mrb[0].mxu0
    %1722 = vmatprep.mubr.bf16.mxu0 0
    %1723 = vmatmul.mubr.bf16.gmra.mrb[0].mxu0 %v1482
    %v1724 = vpop.f32.mrb[0].mxu0
    %v1725 = vadd.f32 %v1580, %v1724
    %v1726 = vpop.f32.mrb[0].mxu0
    %v1727 = vpop.f32.mrb[0].mxu0
    %v1728 = vadd.f32 %v1583, %v1727
    %v1729 = vpop.f32.mrb[0].mxu0
    %1730 = vmatprep.mubr.bf16.mxu0 0
    %1731 = vmatmul.mubr.bf16.gmra.mrb[0].mxu0 %v1483
    %v1732 = vpop.f32.mrb[0].mxu0
    %v1733 = vadd.f32 %v1588, %v1732
    %v1734 = vpop.f32.mrb[0].mxu0
    %v1735 = vpop.f32.mrb[0].mxu0
    %v1736 = vadd.f32 %v1591, %v1735
    %v1737 = vpop.f32.mrb[0].mxu0
    %1738 = vmatprep.mubr.bf16.mxu0 0
    %1739 = vmatmul.mubr.bf16.gmra.mrb[0].mxu0 %v1484
    %v1740 = vpop.f32.mrb[0].mxu0
    %v1741 = vadd.f32 %v1596, %v1740
    %v1742 = vpop.f32.mrb[0].mxu0
    %v1743 = vpop.f32.mrb[0].mxu0
    %v1744 = vadd.f32 %v1599, %v1743
    %v1745 = vpop.f32.mrb[0].mxu0
    %1746 = vmatprep.mubr.bf16.mxu0 0
    %1747 = vmatmul.mubr.bf16.gmra.mrb[0].mxu0 %v1485
    %v1748 = vpop.f32.mrb[0].mxu0
    %v1749 = vadd.f32 %v1604, %v1748
    %v1750 = vpop.f32.mrb[0].mxu0
    %v1751 = vpop.f32.mrb[0].mxu0
    %v1752 = vadd.f32 %v1607, %v1751
    %v1753 = vpop.f32.mrb[0].mxu0
    %1754 = vmatprep.mubr.bf16.mxu0 0
    %1755 = vmatmul.mubr.bf16.gmra.mrb[0].mxu0 %v1486
    %v1756 = vpop.f32.mrb[0].mxu0
    %v1757 = vadd.f32 %v1612, %v1756
    %v1758 = vpop.f32.mrb[0].mxu0
    %v1759 = vpop.f32.mrb[0].mxu0
    %v1760 = vadd.f32 %v1615, %v1759
    %v1761 = vpop.f32.mrb[0].mxu0
    %1762 = vmatprep.mubr.bf16.mxu0 0
    %1763 = vmatmul.mubr.bf16.gmra.mrb[0].mxu0 %v1487
    %v1764 = vpop.f32.mrb[0].mxu0
    %v1765 = vadd.f32 %v1620, %v1764
    %v1766 = vpop.f32.mrb[0].mxu0
    %v1767 = vpop.f32.mrb[0].mxu0
    %v1768 = vadd.f32 %v1623, %v1767
    %v1769 = vpop.f32.mrb[0].mxu0
    %1770 = vmatprep.mubr.bf16.mxu0 0
    %1771 = vmatmul.mubr.bf16.gmra.mrb[0].mxu0 %v1488
    %v1772 = vpop.f32.mrb[0].mxu0
    %v1773 = vadd.f32 %v1628, %v1772
    %v1774 = vpop.f32.mrb[0].mxu0
    %v1775 = vpop.f32.mrb[0].mxu0
    %v1776 = vadd.f32 %v1631, %v1775
    %v1777 = vpop.f32.mrb[0].mxu0
    %1778 = vdwg.mxu0
    %v1780 = vlaneseq
    %v1781 = vshrl.u32 %v1780, 7
    %v1782 = vsub.s32 0, %v1781
    %v1783 = vrot.slane %v1367, %v1782
    %v1785 = vadd.f32 %v1717, %v1783
    %v1786 = vadd.f32 %v1720, %v1783
    %v1787 = vadd.f32 %v1725, %v1783
    %v1788 = vadd.f32 %v1728, %v1783
    %v1789 = vadd.f32 %v1733, %v1783
    %v1790 = vadd.f32 %v1736, %v1783
    %v1791 = vadd.f32 %v1741, %v1783
    %v1792 = vadd.f32 %v1744, %v1783
    %v1793 = vadd.f32 %v1749, %v1783
    %v1794 = vadd.f32 %v1752, %v1783
    %v1795 = vadd.f32 %v1757, %v1783
    %v1796 = vadd.f32 %v1760, %v1783
    %v1797 = vadd.f32 %v1765, %v1783
    %v1798 = vadd.f32 %v1768, %v1783
    %v1799 = vadd.f32 %v1773, %v1783
    %v1800 = vadd.f32 %v1776, %v1783
    %v1801 = vpack.c.bf16 %v1786, %v1785
    %v1802 = vpack.c.bf16 %v1788, %v1787
    %v1803 = vpack.c.bf16 %v1790, %v1789
    %v1804 = vpack.c.bf16 %v1792, %v1791
    %v1805 = vpack.c.bf16 %v1794, %v1793
    %v1806 = vpack.c.bf16 %v1796, %v1795
    %v1807 = vpack.c.bf16 %v1798, %v1797
    %v1808 = vpack.c.bf16 %v1800, %v1799
    %v1809 = vld [vmem:[%s2] sm:$0xf]
    %1810 = vmatprep.subr.bf16.mxu0 0
    %1811 = vmatpush1.bf16.msra.mxu0 %v1801
    %1812 = vmatprep.subr.bf16.mxu0 0
    %1813 = vmatpush1.bf16.msra.mxu0 %v1802
    %1814 = vmatprep.subr.bf16.mxu0 0
    %1815 = vmatpush1.bf16.msra.mxu0 %v1803
    %1816 = vmatprep.subr.bf16.mxu0 0
    %1817 = vmatpush1.bf16.msra.mxu0 %v1804
    %1818 = vmatprep.subr.bf16.mxu0 0
    %1819 = vmatpush1.bf16.msra.mxu0 %v1805
    %1820 = vmatprep.subr.bf16.mxu0 0
    %1821 = vmatpush1.bf16.msra.mxu0 %v1806
    %1822 = vmatprep.subr.bf16.mxu0 0
    %1823 = vmatpush1.bf16.msra.mxu0 %v1807
    %1824 = vmatprep.subr.bf16.mxu0 0
    %1825 = vmatpush1.bf16.msra.mxu0 %v1808
    %1826 = vmatprep.subr.bf16.mxu0 0
    %1827 = vmatpush1.bf16.msra.mxu0 0
    %1828 = vmatprep.subr.bf16.mxu0 0
    %1829 = vmatpush1.bf16.msra.mxu0 0
    %1830 = vmatprep.subr.bf16.mxu0 0
    %1831 = vmatpush1.bf16.msra.mxu0 0
    %1832 = vmatprep.subr.bf16.mxu0 0
    %1833 = vmatpush1.bf16.msra.mxu0 0
    %1834 = vmatprep.subr.bf16.mxu0 0
    %1835 = vmatpush1.bf16.msra.mxu0 0
    %1836 = vmatprep.subr.bf16.mxu0 0
    %1837 = vmatpush1.bf16.msra.mxu0 0
    %1838 = vmatprep.subr.bf16.mxu0 0
    %1839 = vmatpush1.bf16.msra.mxu0 0
    %1840 = vmatprep.subr.bf16.mxu0 0
    %1841 = vmatpush1.bf16.msra.mxu0 0
    %1842 = vmatprep.mubr.bf16.mxu0 0
    %1843 = vmatmul.mubr.bf16.gmra.mrb[0].mxu0 %v1809
    %v1844 = vpop.f32.mrb[0].mxu0
    %v1845 = vadd.f32 0.0, %v1844
    %v1846 = vpop.f32.mrb[0].mxu0
    %v1847 = vpop.f32.mrb[0].mxu0
    %v1848 = vpop.f32.mrb[0].mxu0
    %1849 = vdwg.mxu0
    %v1850 = vld [vmem:[%s3] sm:$0xff]
    %1852 = vset.pattern.permute.xlu0 0
    %1853 = vperm.xlu0 %1852, %v1850
    %v1854 = vpop.permute.xlu0 %1853
    %v1856 = vmul.f32 %v1845, %v1854
    %1857 = vst [vmem:[#allocation13] sm:$0xff] %v1856
    // Predicated region
    $region82: #{tpu_custom_call.1} parent=1 // pred_check
      _
    $region83: #{tpu_custom_call.1} parent=1 // pred_check_branch
      %1859 = sbr.rel (0) target = $region85
    $region84: #{tpu_custom_call.1} parent=1 // pred_region
      %s1861 = ssub.s32 128, 128
      %1862 = vsyncadd [#allocation4], %s1861
      %s1864 = sshll.u32 [#allocation13], 4
      %s1865 = int_to_ptr.vmem [resolvable:$true] %s1864
      %1867 = dma.vmem_to_hbm [thread:$0]  %s1865, 128, %s14, [#allocation4]
    $region85: #{tpu_custom_call.1} parent=1 // pred_fallthru
      _
    // Predicated region
    $region86: #{tpu_custom_call.1} parent=1 // pred_check
      _
    $region87: #{tpu_custom_call.1} parent=1 // pred_check_branch
      %1869 = sbr.rel (0) target = $region89
    $region88: #{tpu_custom_call.1} parent=1 // pred_region
      %1870 = dma.done [#allocation4], 128
    $region89: #{tpu_custom_call.1} parent=1 // pred_fallthru
      _
    %1871 = vsyncpa [#allocation3], 1
    %1872 = vsyncpa [#allocation6], 1
    %1873 = vsyncpa [#allocation9], 1
    %1874 = vsyncpa [#allocation12], 1
    %1875 = vsyncpa [#allocation4], 1

</llo_original>
